<compile_context>
chip_gen: v6e
topology: v6e:2x2x1
jax: 0.10.0
libtpu: 0.0.40
codegen_flags: <defaults>
</compile_context>

<pallas_src>
import functools

import jax
import jax.numpy as jnp
from jax import lax
from jax.experimental import pallas as pl
from jax.experimental.pallas import tpu as pltpu

_VMEM_LIMIT_BYTES = 32 * 1024 * 1024   # within v5e/v6e/v7x scoped-VMEM budgets


# --------------------------------------------------------------------------
# Kernel 1: 3x3 "same" conv (no bias) for one batch element, fused with
# per-channel partial BatchNorm statistics.
# --------------------------------------------------------------------------
def _conv3x3_stats_kernel(x_ref, w_ref, y_ref, sum_ref, sumsq_ref,
                          *, H, W, Cin, Cout):
    """x_ref   : (1, Cin, H, W)   f32   NCHW activation block (cast on-chip)
       w_ref   : (Cout, 9*Cin)    bf16  weights, K index = (dy*3+dx)*Cin + ci
       y_ref   : (1, Cout, H*W)   f32   conv output (flattened NCHW, lane-dense)
       sum_ref / sumsq_ref : (1, Cout, 1) f32 partial BN statistics."""
    del Cout  # implied by w_ref / y_ref shapes
    # On-chip halo padding in bf16 (the padded copy never touches HBM).
    x = x_ref[0].astype(jnp.bfloat16)                         # (Cin, H, W)
    zrow = jnp.zeros((Cin, 1, W), jnp.bfloat16)
    xp = jnp.concatenate([zrow, x, zrow], axis=1)             # (Cin, H+2, W)
    zcol = jnp.zeros((Cin, H + 2, 1), jnp.bfloat16)
    xp = jnp.concatenate([zcol, xp, zcol], axis=2)            # (Cin, H+2, W+2)

    # im2col: one (9*Cin, H*W) patch matrix -> a single MXU contraction.
    rows = [xp[:, dy:dy + H, dx:dx + W].reshape(Cin, H * W)
            for dy in range(3) for dx in range(3)]
    patches = jnp.concatenate(rows, axis=0)                   # (9*Cin, H*W) bf16

    # (Cout, 9*Cin) . (9*Cin, H*W) -> (Cout, H*W), f32 accumulation on MXU.
    acc = jnp.dot(w_ref[...], patches, preferred_element_type=jnp.float32)
    y_ref[0] = acc

    # Partial batch-norm statistics (lane-axis reductions) fused here so the
    # BN stage never re-reads y just to compute mean/var.
    sum_ref[0] = jnp.sum(acc, axis=1, keepdims=True)
    sumsq_ref[0] = jnp.sum(acc * acc, axis=1, keepdims=True)


# --------------------------------------------------------------------------
# Kernel 2: y * scale + shift, ReLU — lane-dense (Cout, tile) blocks.
# --------------------------------------------------------------------------
def _bn_relu_kernel(y_ref, scale_ref, shift_ref, o_ref):
    # y_ref / o_ref: (1, Cout, tile) f32; scale/shift: (Cout, 1) f32.
    o_ref[0] = jnp.maximum(y_ref[0] * scale_ref[...] + shift_ref[...], 0.0)


def _pick_spatial_tile(hw, cout, itemsize=4, budget_bytes=2 * 1024 * 1024):
    """Largest 128-aligned divisor of hw whose double-buffered in+out
    (cout, tile) blocks fit the budget; fall back to the full extent."""
    def fits(t):
        return 4 * t * cout * itemsize <= budget_bytes
    aligned = [d for d in range(128, hw + 1, 128) if hw % d == 0 and fits(d)]
    return max(aligned) if aligned else hw


# --------------------------------------------------------------------------
# Wrapper: NCHW float32 in, NCHW float32 out (matches PyTorch).
# --------------------------------------------------------------------------
def _conv_bn_relu_impl(x_nchw, weight_oihw, gamma, beta, eps=1e-5):
    N, Cin, H, W = x_nchw.shape
    Cout = weight_oihw.shape[0]
    HW = H * W

    # Weight glue only (tiny): (Cout, Cin, 3, 3) -> (Cout, 9*Cin) with
    # K index (dy*3+dx)*Cin + ci.  Activations go to the kernel untouched.
    w2d = jnp.transpose(weight_oihw, (2, 3, 1, 0)).reshape(9 * Cin, Cout).T
    w2d = w2d.astype(jnp.bfloat16)

    conv = pl.pallas_call(
        functools.partial(_conv3x3_stats_kernel, H=H, W=W, Cin=Cin, Cout=Cout),
        grid=(N,),
        in_specs=[
            pl.BlockSpec((1, Cin, H, W), lambda n: (n, 0, 0, 0)),
            pl.BlockSpec((Cout, 9 * Cin), lambda n: (0, 0)),
        ],
        out_specs=[
            pl.BlockSpec((1, Cout, HW), lambda n: (n, 0, 0)),
            pl.BlockSpec((1, Cout, 1), lambda n: (n, 0, 0)),
            pl.BlockSpec((1, Cout, 1), lambda n: (n, 0, 0)),
        ],
        out_shape=(
            jax.ShapeDtypeStruct((N, Cout, HW), jnp.float32),
            jax.ShapeDtypeStruct((N, Cout, 1), jnp.float32),
            jax.ShapeDtypeStruct((N, Cout, 1), jnp.float32),
        ),
        compiler_params=pltpu.CompilerParams(
            dimension_semantics=("parallel",),
            vmem_limit_bytes=_VMEM_LIMIT_BYTES),
    )
    # TODO(synk): for very large H*W, add a row-tiled grid axis with explicit
    # halo DMA; at UNet refine-stage sizes a full (H, W) plane fits VMEM.
    y, psum, psumsq = conv(x_nchw, w2d)

    # Training-mode BatchNorm statistics from the fused partial sums (tiny).
    cnt = jnp.float32(N * HW)
    mean = jnp.sum(psum[:, :, 0], axis=0) / cnt                      # (Cout,)
    var = jnp.maximum(jnp.sum(psumsq[:, :, 0], axis=0) / cnt - mean * mean, 0.0)
    scale = gamma.astype(jnp.float32) * lax.rsqrt(var + eps)
    shift = beta.astype(jnp.float32) - mean * scale
    scale2 = scale.reshape(Cout, 1)
    shift2 = shift.reshape(Cout, 1)

    # Pass 2: normalize + ReLU.  The conv activation buffer is aliased into
    # the output (same shape/dtype, written exactly once per block).
    s_tile = _pick_spatial_tile(HW, Cout)
    bn = pl.pallas_call(
        _bn_relu_kernel,
        grid=(N, HW // s_tile),
        in_specs=[
            pl.BlockSpec((1, Cout, s_tile), lambda n, s: (n, 0, s)),
            pl.BlockSpec((Cout, 1), lambda n, s: (0, 0)),
            pl.BlockSpec((Cout, 1), lambda n, s: (0, 0)),
        ],
        out_specs=pl.BlockSpec((1, Cout, s_tile), lambda n, s: (n, 0, s)),
        out_shape=jax.ShapeDtypeStruct((N, Cout, HW), jnp.float32),
        input_output_aliases={0: 0},
        compiler_params=pltpu.CompilerParams(
            dimension_semantics=("parallel", "parallel"),
            vmem_limit_bytes=_VMEM_LIMIT_BYTES),
    )
    out = bn(y, scale2, shift2)

    return out.reshape(N, Cout, H, W)   # flattened-NCHW -> NCHW; free reshape


conv_bn_relu = jax.jit(_conv_bn_relu_impl)


# --------------------------------------------------------------------------
# Pure-JAX reference (matches the kernel's precision choices: bf16-rounded
# conv operands with f32 accumulation, f32 training-mode BN with biased var).
# --------------------------------------------------------------------------
def reference(x_nchw, weight_oihw, gamma, beta, eps=1e-5):
    xb = x_nchw.astype(jnp.bfloat16).astype(jnp.float32)
    wb = weight_oihw.astype(jnp.bfloat16).astype(jnp.float32)
    y = lax.conv_general_dilated(
        xb, wb, window_strides=(1, 1), padding=((1, 1), (1, 1)),
        dimension_numbers=("NCHW", "OIHW", "NCHW"))
    mean = jnp.mean(y, axis=(0, 2, 3), keepdims=True)
    var = jnp.mean((y - mean) ** 2, axis=(0, 2, 3), keepdims=True)
    yh = (y - mean) / jnp.sqrt(var + eps)
    yh = yh * gamma.reshape(1, -1, 1, 1) + beta.reshape(1, -1, 1, 1)
    return jnp.maximum(yh, 0.0)


if __name__ == "__main__":
    N, Cin, Cout, H, W = 2, 4, 8, 16, 16

    key = jax.random.PRNGKey(0)
    kx, kw = jax.random.split(key)
    x = jax.random.normal(kx, (N, Cin, H, W), dtype=jnp.float32)
    # Conv2d weight (out_channels, in_channels, 3, 3); deterministic synthetic init.
    weight = 0.1 * jax.random.normal(kw, (Cout, Cin, 3, 3), dtype=jnp.float32)
    # BatchNorm2d default init: gamma = 1, beta = 0.
    gamma = jnp.ones((Cout,), jnp.float32)
    beta = jnp.zeros((Cout,), jnp.float32)

    out = jax.block_until_ready(conv_bn_relu(x, weight, gamma, beta))
    ref = reference(x, weight, gamma, beta)

    assert out.shape == (N, Cout, H, W), out.shape
    err = float(jnp.max(jnp.abs(out - ref)))
    assert err < 2e-3, f"max abs err {err}"

    print("KERNEL_OK")
</pallas_src>

<mosaic_0001>
module attributes {stable_mosaic.version = 11 : i64} {
  func.func @_conv3x3_stats_kernel(%arg0: i32, %arg1: memref<1x4x16x16xf32, #tpu.memory_space<vmem>>, %arg2: memref<8x36xbf16, #tpu.memory_space<vmem>>, %arg3: memref<1x8x256xf32, #tpu.memory_space<vmem>>, %arg4: memref<1x8x1xf32, #tpu.memory_space<vmem>>, %arg5: memref<1x8x1xf32, #tpu.memory_space<vmem>>) attributes {dimension_semantics = [#tpu.dimension_semantics<parallel>], iteration_bounds = array<i64: 2>, scalar_prefetch = 0 : i64, scratch_operands = 0 : i64, tpu.core_type = #tpu.core_type<tc>, window_params = [{transform_indices = @transform_0, window_bounds = array<i64: 1, 4, 16, 16>}, {pipeline_mode = #tpu.pipeline_mode<synchronous>, transform_indices = @transform_1, window_bounds = array<i64: 8, 36>}, {transform_indices = @transform_2, window_bounds = array<i64: 1, 8, 256>}, {transform_indices = @transform_3, window_bounds = array<i64: 1, 8, 1>}, {transform_indices = @transform_4, window_bounds = array<i64: 1, 8, 1>}]} {
    %c0 = arith.constant 0 : index
    %c0_0 = arith.constant 0 : index
    %c0_1 = arith.constant 0 : index
    %c0_2 = arith.constant 0 : index
    %0 = vector.load %arg1[%c0, %c0_0, %c0_1, %c0_2] : memref<1x4x16x16xf32, #tpu.memory_space<vmem>>, vector<1x4x16x16xf32>
    %1 = vector.shape_cast %0 : vector<1x4x16x16xf32> to vector<4x16x16xf32>
    %2 = arith.truncf %1 : vector<4x16x16xf32> to vector<4x16x16xbf16>
    %cst = arith.constant 0.000000e+00 : bf16
    %3 = vector.broadcast %cst : bf16 to vector<4x1x16xbf16>
    %4 = tpu.concatenate %3, %2, %3 in 1 : vector<4x1x16xbf16>, vector<4x16x16xbf16>, vector<4x1x16xbf16> -> vector<4x18x16xbf16>
    %cst_3 = arith.constant 0.000000e+00 : bf16
    %5 = vector.broadcast %cst_3 : bf16 to vector<4x18x1xbf16>
    %6 = tpu.concatenate %5, %4, %5 in 2 : vector<4x18x1xbf16>, vector<4x18x16xbf16>, vector<4x18x1xbf16> -> vector<4x18x18xbf16>
    %7 = vector.extract_strided_slice %6 {offsets = [0, 0, 0], sizes = [4, 16, 16], strides = [1, 1, 1]} : vector<4x18x18xbf16> to vector<4x16x16xbf16>
    %8 = vector.shape_cast %7 : vector<4x16x16xbf16> to vector<4x256xbf16>
    %9 = vector.extract_strided_slice %6 {offsets = [0, 0, 1], sizes = [4, 16, 16], strides = [1, 1, 1]} : vector<4x18x18xbf16> to vector<4x16x16xbf16>
    %10 = vector.shape_cast %9 : vector<4x16x16xbf16> to vector<4x256xbf16>
    %11 = vector.extract_strided_slice %6 {offsets = [0, 0, 2], sizes = [4, 16, 16], strides = [1, 1, 1]} : vector<4x18x18xbf16> to vector<4x16x16xbf16>
    %12 = vector.shape_cast %11 : vector<4x16x16xbf16> to vector<4x256xbf16>
    %13 = vector.extract_strided_slice %6 {offsets = [0, 1, 0], sizes = [4, 16, 16], strides = [1, 1, 1]} : vector<4x18x18xbf16> to vector<4x16x16xbf16>
    %14 = vector.shape_cast %13 : vector<4x16x16xbf16> to vector<4x256xbf16>
    %15 = vector.extract_strided_slice %6 {offsets = [0, 1, 1], sizes = [4, 16, 16], strides = [1, 1, 1]} : vector<4x18x18xbf16> to vector<4x16x16xbf16>
    %16 = vector.shape_cast %15 : vector<4x16x16xbf16> to vector<4x256xbf16>
    %17 = vector.extract_strided_slice %6 {offsets = [0, 1, 2], sizes = [4, 16, 16], strides = [1, 1, 1]} : vector<4x18x18xbf16> to vector<4x16x16xbf16>
    %18 = vector.shape_cast %17 : vector<4x16x16xbf16> to vector<4x256xbf16>
    %19 = vector.extract_strided_slice %6 {offsets = [0, 2, 0], sizes = [4, 16, 16], strides = [1, 1, 1]} : vector<4x18x18xbf16> to vector<4x16x16xbf16>
    %20 = vector.shape_cast %19 : vector<4x16x16xbf16> to vector<4x256xbf16>
    %21 = vector.extract_strided_slice %6 {offsets = [0, 2, 1], sizes = [4, 16, 16], strides = [1, 1, 1]} : vector<4x18x18xbf16> to vector<4x16x16xbf16>
    %22 = vector.shape_cast %21 : vector<4x16x16xbf16> to vector<4x256xbf16>
    %23 = vector.extract_strided_slice %6 {offsets = [0, 2, 2], sizes = [4, 16, 16], strides = [1, 1, 1]} : vector<4x18x18xbf16> to vector<4x16x16xbf16>
    %24 = vector.shape_cast %23 : vector<4x16x16xbf16> to vector<4x256xbf16>
    %25 = tpu.concatenate %8, %10, %12, %14, %16, %18, %20, %22, %24 in 0 : vector<4x256xbf16>, vector<4x256xbf16>, vector<4x256xbf16>, vector<4x256xbf16>, vector<4x256xbf16>, vector<4x256xbf16>, vector<4x256xbf16>, vector<4x256xbf16>, vector<4x256xbf16> -> vector<36x256xbf16>
    %c0_4 = arith.constant 0 : index
    %c0_5 = arith.constant 0 : index
    %26 = vector.load %arg2[%c0_4, %c0_5] : memref<8x36xbf16, #tpu.memory_space<vmem>>, vector<8x36xbf16>
    %cst_6 = arith.constant dense<0.000000e+00> : vector<8x256xf32>
    %27 = tpu.matmul %26, %25, %cst_6 {dimension_numbers = #tpu.dot_dimension_numbers<[1], [0], [0], [1], [0, 0, 1, 1], [], []>} : vector<8x36xbf16>, vector<36x256xbf16>, vector<8x256xf32> -> vector<8x256xf32>
    %c0_7 = arith.constant 0 : index
    %c0_8 = arith.constant 0 : index
    %c0_9 = arith.constant 0 : index
    %28 = vector.load %arg3[%c0_7, %c0_8, %c0_9] : memref<1x8x256xf32, #tpu.memory_space<vmem>>, vector<1x8x256xf32>
    %29 = vector.shape_cast %28 : vector<1x8x256xf32> to vector<8x256xf32>
    %30 = vector.shape_cast %27 : vector<8x256xf32> to vector<1x8x256xf32>
    tpu.vector_store %arg3[%c0_7, %c0_8, %c0_9], %30 {strides = array<i32>} : memref<1x8x256xf32, #tpu.memory_space<vmem>>, vector<1x8x256xf32>,
    %cst_10 = arith.constant dense<0.000000e+00> : vector<8xf32>
    %31 = vector.multi_reduction <add>, %27, %cst_10 [1] : vector<8x256xf32> to vector<8xf32>
    %32 = vector.shape_cast %31 : vector<8xf32> to vector<8x1xf32>
    %c0_11 = arith.constant 0 : index
    %c0_12 = arith.constant 0 : index
    %c0_13 = arith.constant 0 : index
    %33 = vector.load %arg4[%c0_11, %c0_12, %c0_13] : memref<1x8x1xf32, #tpu.memory_space<vmem>>, vector<1x8x1xf32>
    %34 = vector.shape_cast %33 : vector<1x8x1xf32> to vector<8x1xf32>
    %35 = vector.shape_cast %32 : vector<8x1xf32> to vector<1x8x1xf32>
    tpu.vector_store %arg4[%c0_11, %c0_12, %c0_13], %35 {strides = array<i32>} : memref<1x8x1xf32, #tpu.memory_space<vmem>>, vector<1x8x1xf32>,
    %36 = arith.mulf %27, %27 : vector<8x256xf32>
    %cst_14 = arith.constant dense<0.000000e+00> : vector<8xf32>
    %37 = vector.multi_reduction <add>, %36, %cst_14 [1] : vector<8x256xf32> to vector<8xf32>
    %38 = vector.shape_cast %37 : vector<8xf32> to vector<8x1xf32>
    %c0_15 = arith.constant 0 : index
    %c0_16 = arith.constant 0 : index
    %c0_17 = arith.constant 0 : index
    %39 = vector.load %arg5[%c0_15, %c0_16, %c0_17] : memref<1x8x1xf32, #tpu.memory_space<vmem>>, vector<1x8x1xf32>
    %40 = vector.shape_cast %39 : vector<1x8x1xf32> to vector<8x1xf32>
    %41 = vector.shape_cast %38 : vector<8x1xf32> to vector<1x8x1xf32>
    tpu.vector_store %arg5[%c0_15, %c0_16, %c0_17], %41 {strides = array<i32>} : memref<1x8x1xf32, #tpu.memory_space<vmem>>, vector<1x8x1xf32>,
    return
  }
  func.func @transform_0(%arg0: i32) -> (i32, i32, i32, i32) {
    %c0_i32 = arith.constant 0 : i32
    %c0_i32_0 = arith.constant 0 : i32
    %c0_i32_1 = arith.constant 0 : i32
    %c0_i32_2 = arith.constant 0 : i32
    return %arg0, %c0_i32, %c0_i32_0, %c0_i32_1 : i32, i32, i32, i32
  }
  func.func @transform_1(%arg0: i32) -> (i32, i32) {
    %c0_i32 = arith.constant 0 : i32
    %c0_i32_0 = arith.constant 0 : i32
    %c0_i32_1 = arith.constant 0 : i32
    return %c0_i32, %c0_i32_0 : i32, i32
  }
  func.func @transform_2(%arg0: i32) -> (i32, i32, i32) {
    %c0_i32 = arith.constant 0 : i32
    %c0_i32_0 = arith.constant 0 : i32
    %c0_i32_1 = arith.constant 0 : i32
    return %arg0, %c0_i32, %c0_i32_0 : i32, i32, i32
  }
  func.func @transform_3(%arg0: i32) -> (i32, i32, i32) {
    %c0_i32 = arith.constant 0 : i32
    %c0_i32_0 = arith.constant 0 : i32
    %c0_i32_1 = arith.constant 0 : i32
    return %arg0, %c0_i32, %c0_i32_0 : i32, i32, i32
  }
  func.func @transform_4(%arg0: i32) -> (i32, i32, i32) {
    %c0_i32 = arith.constant 0 : i32
    %c0_i32_0 = arith.constant 0 : i32
    %c0_i32_1 = arith.constant 0 : i32
    return %arg0, %c0_i32, %c0_i32_0 : i32, i32, i32
  }
}

module attributes {stable_mosaic.version = 11 : i64} {
  func.func @_bn_relu_kernel(%arg0: i32, %arg1: i32, %arg2: memref<1x8x256xf32, #tpu.memory_space<vmem>>, %arg3: memref<8x1xf32, #tpu.memory_space<vmem>>, %arg4: memref<8x1xf32, #tpu.memory_space<vmem>>, %arg5: memref<1x8x256xf32, #tpu.memory_space<vmem>>) attributes {dimension_semantics = [#tpu.dimension_semantics<parallel>, #tpu.dimension_semantics<parallel>], iteration_bounds = array<i64: 2, 1>, scalar_prefetch = 0 : i64, scratch_operands = 0 : i64, tpu.core_type = #tpu.core_type<tc>, window_params = [{transform_indices = @transform_0, window_bounds = array<i64: 1, 8, 256>}, {pipeline_mode = #tpu.pipeline_mode<synchronous>, transform_indices = @transform_1, window_bounds = array<i64: 8, 1>}, {pipeline_mode = #tpu.pipeline_mode<synchronous>, transform_indices = @transform_2, window_bounds = array<i64: 8, 1>}, {transform_indices = @transform_3, window_bounds = array<i64: 1, 8, 256>}]} {
    %c0 = arith.constant 0 : index
    %c0_0 = arith.constant 0 : index
    %c0_1 = arith.constant 0 : index
    %0 = vector.load %arg2[%c0, %c0_0, %c0_1] : memref<1x8x256xf32, #tpu.memory_space<vmem>>, vector<1x8x256xf32>
    %1 = vector.shape_cast %0 : vector<1x8x256xf32> to vector<8x256xf32>
    %c0_2 = arith.constant 0 : index
    %c0_3 = arith.constant 0 : index
    %2 = vector.load %arg3[%c0_2, %c0_3] : memref<8x1xf32, #tpu.memory_space<vmem>>, vector<8x1xf32>
    %3 = vector.broadcast %2 : vector<8x1xf32> to vector<8x256xf32>
    %4 = arith.mulf %1, %3 : vector<8x256xf32>
    %c0_4 = arith.constant 0 : index
    %c0_5 = arith.constant 0 : index
    %5 = vector.load %arg4[%c0_4, %c0_5] : memref<8x1xf32, #tpu.memory_space<vmem>>, vector<8x1xf32>
    %6 = vector.broadcast %5 : vector<8x1xf32> to vector<8x256xf32>
    %7 = arith.addf %4, %6 : vector<8x256xf32>
    %cst = arith.constant 0.000000e+00 : f32
    %8 = vector.broadcast %cst : f32 to vector<8x256xf32>
    %9 = arith.maximumf %7, %8 : vector<8x256xf32>
    %c0_6 = arith.constant 0 : index
    %c0_7 = arith.constant 0 : index
    %c0_8 = arith.constant 0 : index
    %10 = vector.load %arg5[%c0_6, %c0_7, %c0_8] : memref<1x8x256xf32, #tpu.memory_space<vmem>>, vector<1x8x256xf32>
    %11 = vector.shape_cast %10 : vector<1x8x256xf32> to vector<8x256xf32>
    %12 = vector.shape_cast %9 : vector<8x256xf32> to vector<1x8x256xf32>
    tpu.vector_store %arg5[%c0_6, %c0_7, %c0_8], %12 {strides = array<i32>} : memref<1x8x256xf32, #tpu.memory_space<vmem>>, vector<1x8x256xf32>,
    return
  }
  func.func @transform_0(%arg0: i32, %arg1: i32) -> (i32, i32, i32) {
    %c0_i32 = arith.constant 0 : i32
    %c0_i32_0 = arith.constant 0 : i32
    return %arg0, %c0_i32, %arg1 : i32, i32, i32
  }
  func.func @transform_1(%arg0: i32, %arg1: i32) -> (i32, i32) {
    %c0_i32 = arith.constant 0 : i32
    %c0_i32_0 = arith.constant 0 : i32
    %c0_i32_1 = arith.constant 0 : i32
    return %c0_i32, %c0_i32_0 : i32, i32
  }
  func.func @transform_2(%arg0: i32, %arg1: i32) -> (i32, i32) {
    %c0_i32 = arith.constant 0 : i32
    %c0_i32_0 = arith.constant 0 : i32
    %c0_i32_1 = arith.constant 0 : i32
    return %c0_i32, %c0_i32_0 : i32, i32
  }
  func.func @transform_3(%arg0: i32, %arg1: i32) -> (i32, i32, i32) {
    %c0_i32 = arith.constant 0 : i32
    %c0_i32_0 = arith.constant 0 : i32
    return %arg0, %c0_i32, %arg1 : i32, i32, i32
  }
}

</mosaic_0001>

<llo_original>
// kernel: _conv_bn_relu_impl.3
$region0: #{_conv_bn_relu_impl.3}
  #allocation0 [shape = 'u32[]', space=smem, size = 0x4, offset = 0x4, fixed_abs, tag = 'smem constant byte address 0x4 - core index']
  #allocation1 [shape = 'u32[144,128]{1,0:T(1,128)}', space=vmem, size = 0x12000, scoped, tag = 'internal scratch']
  %s0 = inlined_call_operand.vmem [shape: f32[2,8,256], index: 0, kind: input, shape index: {}, may-alias: {0,3}]
  %s1 = inlined_call_operand.vmem [shape: f32[8,1], index: 1, kind: input, shape index: {}]
  %s2 = inlined_call_operand.vmem [shape: f32[8,1], index: 2, kind: input, shape index: {}]
  %s3 = inlined_call_operand.vmem [shape: f32[2,8,256], index: 3, kind: output, shape index: {}, may-alias: {0,3}]
  %s4 = sld [smem:[#allocation0]]
  $region45: #{_conv_bn_relu_impl.3} parent=0
    _
  %s6 = ssub.s32 1, %s4
  %s7 = scalar_select 0, %s6, %s4
  loop: start=0, step=1, limit=4
  $region2: #{_conv_bn_relu_impl.3} parent=0 // loop_pre_header
    _
  $region3: #{_conv_bn_relu_impl.3} parent=0 // loop_header
    %s9 = sphi 0, %s13
    %p10 = scmp.ge.s32.totalorder %s9, 4
    %s16 = sphi 0, %s28
    %s17 = sphi 0, %s24
    %s18 = sphi 0, %s16
    %s19 = sphi 0, %s17
    %s20 = sphi 0, %s18
    %s21 = sphi 0, %s19
    %s33 = sphi 0, %s35
    %s36 = sphi 0, %s33
    %s37 = sphi 0, %s36
    %s53 = sphi 0, %s37
    %s57 = sphi 0, %s57
    %s59 = sphi 0, %s57
    %s60 = sphi 0, %s59
    %s74 = sphi 0, %s60
    %s78 = sphi 0, %s78
    %s80 = sphi 0, %s78
    %s81 = sphi 0, %s80
    %s95 = sphi 0, %s81
    %s103 = sphi 0, %s105
    %s106 = sphi 0, %s103
    %s107 = sphi 0, %s106
    %s123 = sphi 0, %s107
  $region4: #{_conv_bn_relu_impl.3} parent=0 // loop_header_branch
    %12 = sbr.rel (%p10) target = $region8
  $region5: #{_conv_bn_relu_impl.3} parent=0 // loop_body
    %s14 = ssub.s32 %s9, 1
    %s15 = ssub.s32 %s9, 2
    %s22 = sadd.s32 1, %s17
    %p23 = scmp.ge.s32.totalorder %s22, 1
    %s24 = scalar_select %p23, 0, %s22
    %s25 = sadd.s32 1, %s16
    %s26 = scalar_select %p23, %s25, %s16
    %p27 = scmp.ge.s32.totalorder %s26, 2
    %s28 = scalar_select %p27, 0, %s26
    %s29 = ssub.s32 %s16, %s28
    %s30 = ssub.s32 %s17, %s24
    %s31 = sor.u32 %s29, %s30
    %p32 = scmp.eq.s32.totalorder %s31, 0
    %s34 = sadd.s32 %s33, 1
    %s35 = scalar_select %p32, %s33, %s34
    %p38 = pneg %p32
    %p39 = scmp.eq.s32.totalorder %s9, 1
    %p40 = por %p38, %p39
    %p41 = scmp.ne.s32.totalorder %s33, %s36
    %p42 = scmp.eq.s32.totalorder %s9, 0
    %p43 = por %p41, %p42
    %p44 = scmp.ne.s32.totalorder %s33, %s36
    %p45 = scmp.eq.s32.totalorder %s14, 1
    %p46 = por %p44, %p45
    %p47 = scmp.ne.s32.totalorder %s36, %s37
    %p48 = scmp.eq.s32.totalorder %s14, 0
    %p49 = por %p47, %p48
    %p50 = scmp.ne.s32.totalorder %s36, %s37
    %p51 = scmp.eq.s32.totalorder %s15, 1
    %p52 = por %p50, %p51
    %p54 = scmp.ne.s32.totalorder %s37, %s53
    %p55 = scmp.eq.s32.totalorder %s15, 0
    %p56 = por %p54, %p55
    %s58 = sadd.s32 %s57, 1
    %p61 = scmp.eq.s32.totalorder %s9, 1
    %p62 = scmp.ne.s32.totalorder %s57, %s59
    %p63 = scmp.eq.s32.totalorder %s9, 0
    %p64 = por %p62, %p63
    %p65 = scmp.ne.s32.totalorder %s57, %s59
    %p66 = scmp.eq.s32.totalorder %s14, 1
    %p67 = por %p65, %p66
    %p68 = scmp.ne.s32.totalorder %s59, %s60
    %p69 = scmp.eq.s32.totalorder %s14, 0
    %p70 = por %p68, %p69
    %p71 = scmp.ne.s32.totalorder %s59, %s60
    %p72 = scmp.eq.s32.totalorder %s15, 1
    %p73 = por %p71, %p72
    %p75 = scmp.ne.s32.totalorder %s60, %s74
    %p76 = scmp.eq.s32.totalorder %s15, 0
    %p77 = por %p75, %p76
    %s79 = sadd.s32 %s78, 1
    %p82 = scmp.eq.s32.totalorder %s9, 1
    %p83 = scmp.ne.s32.totalorder %s78, %s80
    %p84 = scmp.eq.s32.totalorder %s9, 0
    %p85 = por %p83, %p84
    %p86 = scmp.ne.s32.totalorder %s78, %s80
    %p87 = scmp.eq.s32.totalorder %s14, 1
    %p88 = por %p86, %p87
    %p89 = scmp.ne.s32.totalorder %s80, %s81
    %p90 = scmp.eq.s32.totalorder %s14, 0
    %p91 = por %p89, %p90
    %p92 = scmp.ne.s32.totalorder %s80, %s81
    %p93 = scmp.eq.s32.totalorder %s15, 1
    %p94 = por %p92, %p93
    %p96 = scmp.ne.s32.totalorder %s81, %s95
    %p97 = scmp.eq.s32.totalorder %s15, 0
    %p98 = por %p96, %p97
    %s99 = ssub.s32 %s16, %s28
    %s100 = ssub.s32 %s17, %s24
    %s101 = sor.u32 %s99, %s100
    %p102 = scmp.eq.s32.totalorder %s101, 0
    %s104 = sadd.s32 %s103, 1
    %s105 = scalar_select %p102, %s103, %s104
    %p108 = pneg %p102
    %p109 = scmp.eq.s32.totalorder %s9, 1
    %p110 = por %p108, %p109
    %p111 = scmp.ne.s32.totalorder %s103, %s106
    %p112 = scmp.eq.s32.totalorder %s9, 0
    %p113 = por %p111, %p112
    %p114 = scmp.ne.s32.totalorder %s103, %s106
    %p115 = scmp.eq.s32.totalorder %s14, 1
    %p116 = por %p114, %p115
    %p117 = scmp.ne.s32.totalorder %s106, %s107
    %p118 = scmp.eq.s32.totalorder %s14, 0
    %p119 = por %p117, %p118
    %p120 = scmp.ne.s32.totalorder %s106, %s107
    %p121 = scmp.eq.s32.totalorder %s15, 1
    %p122 = por %p120, %p121
    %p124 = scmp.ne.s32.totalorder %s107, %s123
    %p125 = scmp.eq.s32.totalorder %s15, 0
    %p126 = por %p124, %p125
    %p127 = scmp.le.s32.totalorder 1, %s9
    %p128 = scmp.lt.s32.totalorder %s9, 3
    %p129 = pnand %p127, %p128
    %p130 = pneg %p129
    // Predicated region
    $region9: #{_conv_bn_relu_impl.3} parent=5 // pred_check
      _
    $region10: #{_conv_bn_relu_impl.3} parent=5 // pred_check_branch
      %132 = sbr.rel (%p129) target = $region12
    $region11: #{_conv_bn_relu_impl.3} parent=5 // pred_region
      %s133 = ssub.s32 %s9, 1
      // Predicated region
      $region13: #{_conv_bn_relu_impl.3} parent=11 // pred_check
        %p134 = pneg %p70
      $region14: #{_conv_bn_relu_impl.3} parent=11 // pred_check_branch
        %136 = sbr.rel (%p134) target = $region16
      $region15: #{_conv_bn_relu_impl.3} parent=11 // pred_region
        _
      $region16: #{_conv_bn_relu_impl.3} parent=11 // pred_fallthru
        _
      // Predicated region
      $region17: #{_conv_bn_relu_impl.3} parent=11 // pred_check
        %p137 = pneg %p91
      $region18: #{_conv_bn_relu_impl.3} parent=11 // pred_check_branch
        %139 = sbr.rel (%p137) target = $region20
      $region19: #{_conv_bn_relu_impl.3} parent=11 // pred_region
        _
      $region20: #{_conv_bn_relu_impl.3} parent=11 // pred_fallthru
        _
    $region12: #{_conv_bn_relu_impl.3} parent=5 // pred_fallthru
      _
    %p140 = scmp.lt.s32.totalorder %s9, 2
    // Predicated region
    $region21: #{_conv_bn_relu_impl.3} parent=5 // pred_check
      %p141 = pneg %p140
    $region22: #{_conv_bn_relu_impl.3} parent=5 // pred_check_branch
      %143 = sbr.rel (%p141) target = $region24
    $region23: #{_conv_bn_relu_impl.3} parent=5 // pred_region
      // Predicated region
      $region25: #{_conv_bn_relu_impl.3} parent=23 // pred_check
        %p144 = pneg %p43
      $region26: #{_conv_bn_relu_impl.3} parent=23 // pred_check_branch
        %146 = sbr.rel (%p144) target = $region28
      $region27: #{_conv_bn_relu_impl.3} parent=23 // pred_region
        %s147 = smul.u32 2, %s17
        %p148 = scmp.lt.s32.totalorder %s16, 1
        %s149 = scalar_select %p148, %s16, 1
        %p150 = scmp.lt.s32.totalorder %s147, 1
        %s151 = scalar_select %p150, %s147, 1
        %s152 = smul.addr %s149, 2
        %s153 = sadd.s32 %s151, %s152
        %s154 = smul.addr %s153, 8
        %s155 = scalar_lea.vmem %s0, %s154
        %s156 = smul.u32 2, %s17
      $region28: #{_conv_bn_relu_impl.3} parent=23 // pred_fallthru
        _
    $region24: #{_conv_bn_relu_impl.3} parent=5 // pred_fallthru
      _
    %p157 = scmp.le.s32.totalorder 1, %s9
    %p158 = scmp.lt.s32.totalorder %s9, 3
    %p159 = pnand %p157, %p158
    %p160 = pneg %p159
    // Predicated region
    $region29: #{_conv_bn_relu_impl.3} parent=5 // pred_check
      _
    $region30: #{_conv_bn_relu_impl.3} parent=5 // pred_check_branch
      %162 = sbr.rel (%p159) target = $region32
    $region31: #{_conv_bn_relu_impl.3} parent=5 // pred_region
      %s163 = ssub.s32 %s9, 1
      %s164 = smul.u32 2, %s19
      %p165 = scmp.lt.s32.totalorder %s18, 1
      %s166 = scalar_select %p165, %s18, 1
      %p167 = scmp.lt.s32.totalorder %s164, 1
      %s168 = scalar_select %p167, %s164, 1
      %s169 = smul.addr %s166, 2
      %s170 = sadd.s32 %s168, %s169
      %s171 = smul.addr %s170, 8
      %s172 = scalar_lea.vmem %s0, %s171
      %p173 = pneg %p49
      %p174 = pneg %p46
      %p175 = pneg %p70
      %p176 = pneg %p67
      %p177 = pneg %p91
      %p178 = pneg %p88
      %p179 = pneg %p119
      %p180 = pneg %p116
      %s181 = smul.u32 2, %s19
      %p182 = scmp.lt.s32.totalorder %s18, 1
      %s183 = scalar_select %p182, %s18, 1
      %p184 = scmp.lt.s32.totalorder %s181, 1
      %s185 = scalar_select %p184, %s181, 1
      %s186 = smul.addr %s183, 2
      %s187 = sadd.s32 %s185, %s186
      %s188 = smul.addr %s187, 8
      %s189 = scalar_lea.vmem %s3, %s188
      %s190 = smul.u32 2, %s19
      %p191 = scmp.lt.s32.totalorder %s18, 1
      %s192 = scalar_select %p191, %s18, 1
      %p193 = scmp.lt.s32.totalorder %s190, 1
      %s194 = scalar_select %p193, %s190, 1
      %s195 = smul.addr %s192, 2
      %s196 = sadd.s32 %s194, %s195
      %s197 = smul.addr %s196, 8
      %s198 = scalar_lea.vmem %s0, %s197
      %s199 = smul.u32 2, %s19
      %s200 = smul.u32 2, %s19
      %p201 = scmp.lt.s32.totalorder %s18, 1
      %s202 = scalar_select %p201, %s18, 1
      %p203 = scmp.lt.s32.totalorder %s200, 1
      %s204 = scalar_select %p203, %s200, 1
      %s205 = smul.addr %s202, 2
      %s206 = sadd.s32 %s204, %s205
      %s207 = smul.addr %s206, 8
      %s208 = scalar_lea.vmem %s3, %s207
      %s209 = smul.u32 2, %s19
      %v210 = vld [vmem:[%s198] sm:$0xff]
      %v211 = vld [vmem:[%s198 + $0x8] sm:$0xff]
      %v212 = vld [vmem:[%s1] sm:$0xff]
      %214 = vset.pattern.permute.xlu0 0
      %215 = vperm.xlu0 %214, %v212
      %v216 = vpop.permute.xlu0 %215
      %v218 = vmul.f32 %v210, %v216
      %v219 = vmul.f32 %v211, %v216
      %v220 = vld [vmem:[%s2] sm:$0xff]
      %222 = vset.pattern.permute.xlu0 0
      %223 = vperm.xlu0 %222, %v220
      %v224 = vpop.permute.xlu0 %223
      %v226 = vadd.f32 %v218, %v224
      %v227 = vadd.f32 %v219, %v224
      %v228 = vmax.f32 %v226, 0.0
      %v229 = vmax.f32 %v227, 0.0
      %230 = vst [vmem:[%s208] sm:$0xff] %v228
      %231 = vst [vmem:[%s208 + $0x8] sm:$0xff] %v229
      %s232 = smul.u32 2, %s19
      %p233 = scmp.lt.s32.totalorder %s18, 1
      %s234 = scalar_select %p233, %s18, 1
      %p235 = scmp.lt.s32.totalorder %s232, 1
      %s236 = scalar_select %p235, %s232, 1
      %s237 = smul.addr %s234, 2
      %s238 = sadd.s32 %s236, %s237
      %s239 = smul.addr %s238, 8
      %s240 = scalar_lea.vmem %s3, %s239
      // Predicated region
      $region33: #{_conv_bn_relu_impl.3} parent=31 // pred_check
        %p241 = pneg %p116
      $region34: #{_conv_bn_relu_impl.3} parent=31 // pred_check_branch
        %243 = sbr.rel (%p241) target = $region36
      $region35: #{_conv_bn_relu_impl.3} parent=31 // pred_region
        %s244 = smul.u32 2, %s19
      $region36: #{_conv_bn_relu_impl.3} parent=31 // pred_fallthru
        _
    $region32: #{_conv_bn_relu_impl.3} parent=5 // pred_fallthru
      _
    %p245 = scmp.le.s32.totalorder 2, %s9
    // Predicated region
    $region37: #{_conv_bn_relu_impl.3} parent=5 // pred_check
      %p246 = pneg %p245
    $region38: #{_conv_bn_relu_impl.3} parent=5 // pred_check_branch
      %248 = sbr.rel (%p246) target = $region40
    $region39: #{_conv_bn_relu_impl.3} parent=5 // pred_region
      %s249 = ssub.s32 %s9, 2
      // Predicated region
      $region41: #{_conv_bn_relu_impl.3} parent=39 // pred_check
        %p250 = pneg %p122
      $region42: #{_conv_bn_relu_impl.3} parent=39 // pred_check_branch
        %252 = sbr.rel (%p250) target = $region44
      $region43: #{_conv_bn_relu_impl.3} parent=39 // pred_region
        %s253 = smul.u32 2, %s21
        %p254 = scmp.lt.s32.totalorder %s20, 1
        %s255 = scalar_select %p254, %s20, 1
        %p256 = scmp.lt.s32.totalorder %s253, 1
        %s257 = scalar_select %p256, %s253, 1
        %s258 = smul.addr %s255, 2
        %s259 = sadd.s32 %s257, %s258
        %s260 = smul.addr %s259, 8
        %s261 = scalar_lea.vmem %s3, %s260
      $region44: #{_conv_bn_relu_impl.3} parent=39 // pred_fallthru
        _
    $region40: #{_conv_bn_relu_impl.3} parent=5 // pred_fallthru
      _
  $region6: #{_conv_bn_relu_impl.3} parent=0 // loop_footer
    %s13 = sadd.s32 1, %s9
  $region7: #{_conv_bn_relu_impl.3} parent=0 // loop_footer_branch
    %8 = sbr.rel target = $region3
  $region8: #{_conv_bn_relu_impl.3} parent=0 // loop_exit
    _

// kernel: _conv_bn_relu_impl.2
$region0: #{_conv_bn_relu_impl.2}
  #allocation0 [shape = 'u32[]', space=smem, size = 0x4, offset = 0x4, fixed_abs, tag = 'smem constant byte address 0x4 - core index']
  #allocation1 [shape = 'u32[144,128]{1,0:T(1,128)}', space=vmem, size = 0x12000, scoped, tag = 'internal scratch']
  %s0 = inlined_call_operand.hbm [shape: f32[2,4,16,16], index: 0, kind: input, shape index: {}]
  %s1 = inlined_call_operand.vmem [shape: bf16[8,36], index: 1, kind: input, shape index: {}]
  %s2 = inlined_call_operand.vmem [shape: f32[2,8,256], index: 2, kind: output, shape index: {0}]
  %s3 = inlined_call_operand.vmem [shape: f32[2,8,1], index: 3, kind: output, shape index: {1}]
  %s4 = inlined_call_operand.vmem [shape: f32[2,8,1], index: 4, kind: output, shape index: {2}]
  %5 = xla_tuple %s2, %s3, %s4
  %s6 = sld [smem:[#allocation0]]
  $region61: #{_conv_bn_relu_impl.2} parent=0
    _
  %s8 = ssub.s32 1, %s6
  %s9 = scalar_select 0, %s8, %s6
  $region1: #{_conv_bn_relu_impl.2} parent=0
    #allocation2 [shape = 'u8[65536]{0}', space=vmem, size = 0x10000, scoped, tag = 'input window, operand 0']
    #allocation3 [shape = 's32[2]{0}', space=sflag, size = 0x8, scoped, tag = 'scoped memory for _conv_bn_relu_impl.2']
    %10 = vsyncpa [#allocation3], 0
    %s11 = scalar_lea.sflag [#allocation3], 1
    %12 = vsyncpa %s11, 0
    loop: start=0, step=1, limit=4
    $region2: #{_conv_bn_relu_impl.2} parent=1 // loop_pre_header
      _
    $region3: #{_conv_bn_relu_impl.2} parent=1 // loop_header
      %s14 = sphi 0, %s18
      %p15 = scmp.ge.s32.totalorder %s14, 4
      %s24 = sphi 0, %s26
      %s27 = sphi 0, %s24
      %s28 = sphi 0, %s27
      %s44 = sphi 0, %s28
      %s48 = sphi 0, %s48
      %s50 = sphi 0, %s48
      %s51 = sphi 0, %s50
      %s65 = sphi 0, %s51
      %s71 = sphi 0, %s73
      %s74 = sphi 0, %s71
      %s75 = sphi 0, %s74
      %s91 = sphi 0, %s75
      %s97 = sphi 0, %s99
      %s100 = sphi 0, %s97
      %s101 = sphi 0, %s100
      %s117 = sphi 0, %s101
      %s123 = sphi 0, %s125
      %s126 = sphi 0, %s123
      %s127 = sphi 0, %s126
      %s143 = sphi 0, %s127
    $region4: #{_conv_bn_relu_impl.2} parent=1 // loop_header_branch
      %17 = sbr.rel (%p15) target = $region8
    $region5: #{_conv_bn_relu_impl.2} parent=1 // loop_body
      %s19 = ssub.s32 %s14, 1
      %s20 = ssub.s32 %s14, 2
      %s21 = sadd.s32 %s14, 1
      %s22 = ssub.s32 %s14, %s21
      %p23 = scmp.eq.s32.totalorder %s22, 0
      %s25 = sadd.s32 %s24, 1
      %s26 = scalar_select %p23, %s24, %s25
      %p29 = pneg %p23
      %p30 = scmp.eq.s32.totalorder %s14, 1
      %p31 = por %p29, %p30
      %p32 = scmp.ne.s32.totalorder %s24, %s27
      %p33 = scmp.eq.s32.totalorder %s14, 0
      %p34 = por %p32, %p33
      %p35 = scmp.ne.s32.totalorder %s24, %s27
      %p36 = scmp.eq.s32.totalorder %s19, 1
      %p37 = por %p35, %p36
      %p38 = scmp.ne.s32.totalorder %s27, %s28
      %p39 = scmp.eq.s32.totalorder %s19, 0
      %p40 = por %p38, %p39
      %p41 = scmp.ne.s32.totalorder %s27, %s28
      %p42 = scmp.eq.s32.totalorder %s20, 1
      %p43 = por %p41, %p42
      %p45 = scmp.ne.s32.totalorder %s28, %s44
      %p46 = scmp.eq.s32.totalorder %s20, 0
      %p47 = por %p45, %p46
      %s49 = sadd.s32 %s48, 1
      %p52 = scmp.eq.s32.totalorder %s14, 1
      %p53 = scmp.ne.s32.totalorder %s48, %s50
      %p54 = scmp.eq.s32.totalorder %s14, 0
      %p55 = por %p53, %p54
      %p56 = scmp.ne.s32.totalorder %s48, %s50
      %p57 = scmp.eq.s32.totalorder %s19, 1
      %p58 = por %p56, %p57
      %p59 = scmp.ne.s32.totalorder %s50, %s51
      %p60 = scmp.eq.s32.totalorder %s19, 0
      %p61 = por %p59, %p60
      %p62 = scmp.ne.s32.totalorder %s50, %s51
      %p63 = scmp.eq.s32.totalorder %s20, 1
      %p64 = por %p62, %p63
      %p66 = scmp.ne.s32.totalorder %s51, %s65
      %p67 = scmp.eq.s32.totalorder %s20, 0
      %p68 = por %p66, %p67
      %s69 = ssub.s32 %s14, %s21
      %p70 = scmp.eq.s32.totalorder %s69, 0
      %s72 = sadd.s32 %s71, 1
      %s73 = scalar_select %p70, %s71, %s72
      %p76 = pneg %p70
      %p77 = scmp.eq.s32.totalorder %s14, 1
      %p78 = por %p76, %p77
      %p79 = scmp.ne.s32.totalorder %s71, %s74
      %p80 = scmp.eq.s32.totalorder %s14, 0
      %p81 = por %p79, %p80
      %p82 = scmp.ne.s32.totalorder %s71, %s74
      %p83 = scmp.eq.s32.totalorder %s19, 1
      %p84 = por %p82, %p83
      %p85 = scmp.ne.s32.totalorder %s74, %s75
      %p86 = scmp.eq.s32.totalorder %s19, 0
      %p87 = por %p85, %p86
      %p88 = scmp.ne.s32.totalorder %s74, %s75
      %p89 = scmp.eq.s32.totalorder %s20, 1
      %p90 = por %p88, %p89
      %p92 = scmp.ne.s32.totalorder %s75, %s91
      %p93 = scmp.eq.s32.totalorder %s20, 0
      %p94 = por %p92, %p93
      %s95 = ssub.s32 %s14, %s21
      %p96 = scmp.eq.s32.totalorder %s95, 0
      %s98 = sadd.s32 %s97, 1
      %s99 = scalar_select %p96, %s97, %s98
      %p102 = pneg %p96
      %p103 = scmp.eq.s32.totalorder %s14, 1
      %p104 = por %p102, %p103
      %p105 = scmp.ne.s32.totalorder %s97, %s100
      %p106 = scmp.eq.s32.totalorder %s14, 0
      %p107 = por %p105, %p106
      %p108 = scmp.ne.s32.totalorder %s97, %s100
      %p109 = scmp.eq.s32.totalorder %s19, 1
      %p110 = por %p108, %p109
      %p111 = scmp.ne.s32.totalorder %s100, %s101
      %p112 = scmp.eq.s32.totalorder %s19, 0
      %p113 = por %p111, %p112
      %p114 = scmp.ne.s32.totalorder %s100, %s101
      %p115 = scmp.eq.s32.totalorder %s20, 1
      %p116 = por %p114, %p115
      %p118 = scmp.ne.s32.totalorder %s101, %s117
      %p119 = scmp.eq.s32.totalorder %s20, 0
      %p120 = por %p118, %p119
      %s121 = ssub.s32 %s14, %s21
      %p122 = scmp.eq.s32.totalorder %s121, 0
      %s124 = sadd.s32 %s123, 1
      %s125 = scalar_select %p122, %s123, %s124
      %p128 = pneg %p122
      %p129 = scmp.eq.s32.totalorder %s14, 1
      %p130 = por %p128, %p129
      %p131 = scmp.ne.s32.totalorder %s123, %s126
      %p132 = scmp.eq.s32.totalorder %s14, 0
      %p133 = por %p131, %p132
      %p134 = scmp.ne.s32.totalorder %s123, %s126
      %p135 = scmp.eq.s32.totalorder %s19, 1
      %p136 = por %p134, %p135
      %p137 = scmp.ne.s32.totalorder %s126, %s127
      %p138 = scmp.eq.s32.totalorder %s19, 0
      %p139 = por %p137, %p138
      %p140 = scmp.ne.s32.totalorder %s126, %s127
      %p141 = scmp.eq.s32.totalorder %s20, 1
      %p142 = por %p140, %p141
      %p144 = scmp.ne.s32.totalorder %s127, %s143
      %p145 = scmp.eq.s32.totalorder %s20, 0
      %p146 = por %p144, %p145
      %p147 = scmp.le.s32.totalorder 1, %s14
      %p148 = scmp.lt.s32.totalorder %s14, 3
      %p149 = pnand %p147, %p148
      %p150 = pneg %p149
      // Predicated region
      $region9: #{_conv_bn_relu_impl.2} parent=5 // pred_check
        _
      $region10: #{_conv_bn_relu_impl.2} parent=5 // pred_check_branch
        %152 = sbr.rel (%p149) target = $region12
      $region11: #{_conv_bn_relu_impl.2} parent=5 // pred_region
        %s153 = ssub.s32 %s14, 1
        // Predicated region
        $region13: #{_conv_bn_relu_impl.2} parent=11 // pred_check
          %p154 = pneg %p61
        $region14: #{_conv_bn_relu_impl.2} parent=11 // pred_check_branch
          %156 = sbr.rel (%p154) target = $region16
        $region15: #{_conv_bn_relu_impl.2} parent=11 // pred_region
          _
        $region16: #{_conv_bn_relu_impl.2} parent=11 // pred_fallthru
          _
      $region12: #{_conv_bn_relu_impl.2} parent=5 // pred_fallthru
        _
      %p157 = scmp.lt.s32.totalorder %s14, 2
      // Predicated region
      $region17: #{_conv_bn_relu_impl.2} parent=5 // pred_check
        %p158 = pneg %p157
      $region18: #{_conv_bn_relu_impl.2} parent=5 // pred_check_branch
        %160 = sbr.rel (%p158) target = $region20
      $region19: #{_conv_bn_relu_impl.2} parent=5 // pred_region
        // Predicated region
        $region21: #{_conv_bn_relu_impl.2} parent=19 // pred_check
          %p161 = pneg %p34
        $region22: #{_conv_bn_relu_impl.2} parent=19 // pred_check_branch
          %163 = sbr.rel (%p161) target = $region24
        $region23: #{_conv_bn_relu_impl.2} parent=19 // pred_region
          %s164 = sand.u32 %s24, 1
          %s165 = scalar_lea.sflag [#allocation3], %s164
          %s166 = sand.u32 %s24, 1
          %s167 = smul.addr %s166, 64
          %s168 = scalar_lea.vmem [#allocation2], %s167
          %s170 = ssub.s32 1024, 1024
          %171 = vsyncadd %s165, %s170
          %s172 = smul.addr %s14, 8
          %s173 = smul.addr %s172, 128
          %s174 = scalar_lea.hbm %s0, %s173
          %s175 = sshll.u32 %s168, 4
          %s176 = int_to_ptr.vmem [resolvable:$true] %s175
          %181 = dma.hbm_to_vmem [thread:$0]  %s174, 1024, %s176, %s165, 128, 128, 8
        $region24: #{_conv_bn_relu_impl.2} parent=19 // pred_fallthru
          _
      $region20: #{_conv_bn_relu_impl.2} parent=5 // pred_fallthru
        _
      %p182 = scmp.le.s32.totalorder 1, %s14
      %p183 = scmp.lt.s32.totalorder %s14, 3
      %p184 = pnand %p182, %p183
      %p185 = pneg %p184
      // Predicated region
      $region25: #{_conv_bn_relu_impl.2} parent=5 // pred_check
        _
      $region26: #{_conv_bn_relu_impl.2} parent=5 // pred_check_branch
        %187 = sbr.rel (%p184) target = $region28
      $region27: #{_conv_bn_relu_impl.2} parent=5 // pred_region
        %s188 = ssub.s32 %s14, 1
        %s189 = sand.u32 %s27, 1
        %s190 = scalar_lea.sflag [#allocation3], %s189
        %s191 = sand.u32 %s27, 1
        %s192 = smul.addr %s191, 64
        %s193 = scalar_lea.vmem [#allocation2], %s192
        // Predicated region
        $region29: #{_conv_bn_relu_impl.2} parent=27 // pred_check
          %p194 = pneg %p40
        $region30: #{_conv_bn_relu_impl.2} parent=27 // pred_check_branch
          %196 = sbr.rel (%p194) target = $region32
        $region31: #{_conv_bn_relu_impl.2} parent=27 // pred_region
          %197 = dma.done %s190, 1024
        $region32: #{_conv_bn_relu_impl.2} parent=27 // pred_fallthru
          _
        %s198 = sand.u32 %s27, 1
        %s199 = scalar_lea.sflag [#allocation3], %s198
        %s200 = sand.u32 %s27, 1
        %s201 = smul.addr %s200, 64
        %s202 = scalar_lea.vmem [#allocation2], %s201
        %p203 = pneg %p40
        %p204 = pneg %p37
        %p205 = pneg %p61
        %p206 = pneg %p58
        %p207 = pneg %p87
        %p208 = pneg %p84
        %p209 = scmp.lt.s32.totalorder %s19, 1
        %s210 = scalar_select %p209, %s19, 1
        %s211 = smul.addr %s210, 2
        %s212 = smul.addr %s211, 8
        %s213 = scalar_lea.vmem %s2, %s212
        %p214 = pneg %p113
        %p215 = pneg %p110
        %p216 = scmp.lt.s32.totalorder %s19, 1
        %s217 = scalar_select %p216, %s19, 1
        %s218 = smul.addr %s217, 8
        %s219 = scalar_lea.vmem %s3, %s218
        %p220 = pneg %p139
        %p221 = pneg %p136
        %p222 = scmp.lt.s32.totalorder %s19, 1
        %s223 = scalar_select %p222, %s19, 1
        %s224 = smul.addr %s223, 8
        %s225 = scalar_lea.vmem %s4, %s224
        %p226 = scmp.lt.s32.totalorder %s19, 1
        %s227 = scalar_select %p226, %s19, 1
        %s228 = smul.addr %s227, 2
        %s229 = smul.addr %s228, 8
        %s230 = scalar_lea.vmem %s2, %s229
        %p231 = scmp.lt.s32.totalorder %s19, 1
        %s232 = scalar_select %p231, %s19, 1
        %s233 = smul.addr %s232, 8
        %s234 = scalar_lea.vmem %s3, %s233
        %p235 = scmp.lt.s32.totalorder %s19, 1
        %s236 = scalar_select %p235, %s19, 1
        %s237 = smul.addr %s236, 8
        %s238 = scalar_lea.vmem %s4, %s237
        %v240 = vld [vmem:[%s193] sm:$0xff]
        %v241 = vld [vmem:[%s193 + $0x8] sm:$0xff]
        %v242 = vld [vmem:[%s193 + $0x10] sm:$0xff]
        %v243 = vld [vmem:[%s193 + $0x18] sm:$0xff]
        %v244 = vld [vmem:[%s193 + $0x20] sm:$0xff]
        %v245 = vld [vmem:[%s193 + $0x28] sm:$0xff]
        %v246 = vld [vmem:[%s193 + $0x30] sm:$0xff]
        %v247 = vld [vmem:[%s193 + $0x38] sm:$0xff]
        %v248 = vpack.c.bf16 %v241, %v240
        %v249 = vpack.c.bf16 %v243, %v242
        %v250 = vpack.c.bf16 %v245, %v244
        %v251 = vpack.c.bf16 %v247, %v246
        %v253 = vshrl.u32 %v248, 16
        %v255 = vrot.slane %v253, 7
        %v256 = vshll.u32 %v248, 16
        %v258 = vor.u32 %v255, %v256
        %v260 = vshrl.u32 %v249, 16
        %v262 = vrot.slane %v260, 7
        %v263 = vshll.u32 %v249, 16
        %v265 = vor.u32 %v262, %v263
        %v267 = vshrl.u32 %v250, 16
        %v269 = vrot.slane %v267, 7
        %v270 = vshll.u32 %v250, 16
        %v272 = vor.u32 %v269, %v270
        %v274 = vshrl.u32 %v251, 16
        %v276 = vrot.slane %v274, 7
        %v277 = vshll.u32 %v251, 16
        %v279 = vor.u32 %v276, %v277
        %vm288 = vcmask 1040384
        %vm289 = vsmask.f32 256
        %vm290 = vmand %vm288, %vm289
        %v291 = vsel %vm290, 0, %v258
        %v292 = vsel %vm290, 0, %v265
        %v293 = vsel %vm290, 0, %v272
        %v294 = vsel %vm290, 0, %v279
        %v295 = vsel %vm290, %v255, 0
        %v296 = vsel %vm290, %v262, 0
        %v297 = vsel %vm290, %v269, 0
        %v298 = vsel %vm290, %v276, 0
        %307 = vrot.lane.b32.xlu0 %v291, 1
        %v308 = vpop.permute.xlu0 %307
        %309 = vrot.lane.b32.xlu0 %v295, 1
        %v310 = vpop.permute.xlu0 %309
        %311 = vrot.lane.b32.xlu0 %v292, 1
        %v312 = vpop.permute.xlu0 %311
        %313 = vrot.lane.b32.xlu0 %v296, 1
        %v314 = vpop.permute.xlu0 %313
        %315 = vrot.lane.b32.xlu0 %v293, 1
        %v316 = vpop.permute.xlu0 %315
        %317 = vrot.lane.b32.xlu0 %v297, 1
        %v318 = vpop.permute.xlu0 %317
        %319 = vrot.lane.b32.xlu0 %v294, 1
        %v320 = vpop.permute.xlu0 %319
        %321 = vrot.lane.b32.xlu0 %v298, 1
        %v322 = vpop.permute.xlu0 %321
        %vm323 = vcmask 7168
        %v326 = vsel %vm323, 0, %v308
        %v328 = vsel %vm323, 0, %v310
        %v330 = vsel %vm323, 0, %v312
        %v332 = vsel %vm323, 0, %v314
        %v334 = vsel %vm323, 0, %v316
        %v336 = vsel %vm323, 0, %v318
        %v338 = vsel %vm323, 0, %v320
        %v340 = vsel %vm323, 0, %v322
        %vm341 = vcmask 138240
        %v342 = vsel %vm341, %v326, 0
        %v343 = vsel %vm341, %v328, 0
        %v344 = vsel %vm341, %v330, 0
        %v345 = vsel %vm341, %v332, 0
        %v346 = vsel %vm341, %v334, 0
        %v347 = vsel %vm341, %v336, 0
        %v348 = vsel %vm341, %v338, 0
        %v349 = vsel %vm341, %v340, 0
        %v350 = vpack.i.b16 %v344, %v342
        %v352 = vshrl.u32 %v342, 16
        %v353 = vshrl.u32 %v344, 16
        %v354 = vpack.i.b16 %v353, %v352
        %v356 = vpack.i.b16 %v348, %v346
        %v358 = vshrl.u32 %v346, 16
        %v359 = vshrl.u32 %v348, 16
        %v360 = vpack.i.b16 %v359, %v358
        %v362 = vpack.i.b16 0, 0
        %v364 = vshrl.u32 0, 16
        %v365 = vpack.i.b16 %v364, %v364
        %v367 = vcombine.high %v350, %v362
        %v369 = vunpack.c.l.s4 1983009808
        %v370 = vunpack.c.0.s8 %v369
        %v371 = vlaneseq
        %v372 = vshrl.u32 %v371, 7
        %v373 = vsub.s32 %v370, %v372
        %v374 = vrot.slane %v350, %v373
        %v376 = vunpack.c.l.s4 1983009808
        %v377 = vunpack.c.0.s8 %v376
        %v378 = vlaneseq
        %v379 = vshrl.u32 %v378, 7
        %v380 = vsub.s32 %v377, %v379
        %v381 = vrot.slane %v367, %v380
        %v382 = vcombine.high %v356, %v362
        %v384 = vunpack.c.l.s4 1983009808
        %v385 = vunpack.c.0.s8 %v384
        %v386 = vlaneseq
        %v387 = vshrl.u32 %v386, 7
        %v388 = vsub.s32 %v385, %v387
        %v389 = vrot.slane %v356, %v388
        %v391 = vunpack.c.l.s4 1983009808
        %v392 = vunpack.c.0.s8 %v391
        %v393 = vlaneseq
        %v394 = vshrl.u32 %v393, 7
        %v395 = vsub.s32 %v392, %v394
        %v396 = vrot.slane %v382, %v395
        %v397 = vcombine.low %v374, %v389
        %v398 = vcombine.high %v374, %v389
        %v400 = vunpack.c.l.s4 1934713408
        %v401 = vunpack.c.0.s8 %v400
        %v402 = vlaneseq
        %v403 = vshrl.u32 %v402, 7
        %v404 = vsub.s32 %v401, %v403
        %v405 = vrot.slane %v397, %v404
        %v407 = vunpack.c.l.s4 1934713408
        %v408 = vunpack.c.0.s8 %v407
        %v409 = vlaneseq
        %v410 = vshrl.u32 %v409, 7
        %v411 = vsub.s32 %v408, %v410
        %v412 = vrot.slane %v398, %v411
        %v413 = vcombine.low %v381, %v396
        %v414 = vcombine.high %v381, %v396
        %v416 = vunpack.c.l.s4 1934713408
        %v417 = vunpack.c.0.s8 %v416
        %v418 = vlaneseq
        %v419 = vshrl.u32 %v418, 7
        %v420 = vsub.s32 %v417, %v419
        %v421 = vrot.slane %v413, %v420
        %v423 = vunpack.c.l.s4 1934713408
        %v424 = vunpack.c.0.s8 %v423
        %v425 = vlaneseq
        %v426 = vshrl.u32 %v425, 7
        %v427 = vsub.s32 %v424, %v426
        %v428 = vrot.slane %v414, %v427
        %v429 = vcombine.high %v405, 0
        %v430 = vcombine.high %v412, 0
        %v431 = vcombine.high %v421, 0
        %v432 = vcombine.high %v428, 0
        %v433 = vcombine.high %v354, %v365
        %v435 = vunpack.c.l.s4 1983009808
        %v436 = vunpack.c.0.s8 %v435
        %v437 = vlaneseq
        %v438 = vshrl.u32 %v437, 7
        %v439 = vsub.s32 %v436, %v438
        %v440 = vrot.slane %v354, %v439
        %v442 = vunpack.c.l.s4 1983009808
        %v443 = vunpack.c.0.s8 %v442
        %v444 = vlaneseq
        %v445 = vshrl.u32 %v444, 7
        %v446 = vsub.s32 %v443, %v445
        %v447 = vrot.slane %v433, %v446
        %v448 = vcombine.high %v360, %v365
        %v450 = vunpack.c.l.s4 1983009808
        %v451 = vunpack.c.0.s8 %v450
        %v452 = vlaneseq
        %v453 = vshrl.u32 %v452, 7
        %v454 = vsub.s32 %v451, %v453
        %v455 = vrot.slane %v360, %v454
        %v457 = vunpack.c.l.s4 1983009808
        %v458 = vunpack.c.0.s8 %v457
        %v459 = vlaneseq
        %v460 = vshrl.u32 %v459, 7
        %v461 = vsub.s32 %v458, %v460
        %v462 = vrot.slane %v448, %v461
        %v463 = vcombine.low %v440, %v455
        %v464 = vcombine.high %v440, %v455
        %v466 = vunpack.c.l.s4 1934713408
        %v467 = vunpack.c.0.s8 %v466
        %v468 = vlaneseq
        %v469 = vshrl.u32 %v468, 7
        %v470 = vsub.s32 %v467, %v469
        %v471 = vrot.slane %v463, %v470
        %v473 = vunpack.c.l.s4 1934713408
        %v474 = vunpack.c.0.s8 %v473
        %v475 = vlaneseq
        %v476 = vshrl.u32 %v475, 7
        %v477 = vsub.s32 %v474, %v476
        %v478 = vrot.slane %v464, %v477
        %v479 = vcombine.low %v447, %v462
        %v480 = vcombine.high %v447, %v462
        %v482 = vunpack.c.l.s4 1934713408
        %v483 = vunpack.c.0.s8 %v482
        %v484 = vlaneseq
        %v485 = vshrl.u32 %v484, 7
        %v486 = vsub.s32 %v483, %v485
        %v487 = vrot.slane %v479, %v486
        %v489 = vunpack.c.l.s4 1934713408
        %v490 = vunpack.c.0.s8 %v489
        %v491 = vlaneseq
        %v492 = vshrl.u32 %v491, 7
        %v493 = vsub.s32 %v490, %v492
        %v494 = vrot.slane %v480, %v493
        %v495 = vcombine.high %v471, 0
        %v496 = vcombine.high %v478, 0
        %v497 = vcombine.high %v487, 0
        %v498 = vcombine.high %v494, 0
        %500 = vrot.lane.b32.xlu0 %v471, 16
        %v501 = vpop.permute.xlu0 %500
        %503 = vrot.lane.b32.xlu0 %v429, 32
        %v504 = vpop.permute.xlu0 %503
        %506 = vrot.lane.b32.xlu0 %v495, 48
        %v507 = vpop.permute.xlu0 %506
        %509 = vrot.lane.b32.xlu0 %v412, 64
        %v510 = vpop.permute.xlu0 %509
        %512 = vrot.lane.b32.xlu0 %v478, 80
        %v513 = vpop.permute.xlu0 %512
        %515 = vrot.lane.b32.xlu0 %v430, 96
        %v516 = vpop.permute.xlu0 %515
        %518 = vrot.lane.b32.xlu0 %v496, 112
        %v519 = vpop.permute.xlu0 %518
        %521 = vrot.lane.b32.xlu0 %v487, 16
        %v522 = vpop.permute.xlu0 %521
        %524 = vrot.lane.b32.xlu0 %v431, 32
        %v525 = vpop.permute.xlu0 %524
        %527 = vrot.lane.b32.xlu0 %v497, 48
        %v528 = vpop.permute.xlu0 %527
        %530 = vrot.lane.b32.xlu0 %v428, 64
        %v531 = vpop.permute.xlu0 %530
        %533 = vrot.lane.b32.xlu0 %v494, 80
        %v534 = vpop.permute.xlu0 %533
        %536 = vrot.lane.b32.xlu0 %v432, 96
        %v537 = vpop.permute.xlu0 %536
        %539 = vrot.lane.b32.xlu0 %v498, 112
        %v540 = vpop.permute.xlu0 %539
        %vm541 = vcmask 130048
        %v544 = vsel %vm541, %v405, %v501
        %vm545 = vcmask 261120
        %v547 = vsel %vm545, %v544, %v504
        %vm548 = vcmask 392192
        %v550 = vsel %vm548, %v547, %v507
        %vm551 = vcmask 523264
        %v553 = vsel %vm551, %v550, %v510
        %vm554 = vcmask 654336
        %v556 = vsel %vm554, %v553, %v513
        %vm557 = vcmask 785408
        %v559 = vsel %vm557, %v556, %v516
        %vm560 = vcmask 916480
        %v562 = vsel %vm560, %v559, %v519
        %v565 = vsel %vm541, %v421, %v522
        %v567 = vsel %vm545, %v565, %v525
        %v569 = vsel %vm548, %v567, %v528
        %v571 = vsel %vm551, %v569, %v531
        %v573 = vsel %vm554, %v571, %v534
        %v575 = vsel %vm557, %v573, %v537
        %v577 = vsel %vm560, %v575, %v540
        %582 = vrot.lane.b32.xlu0 %v342, 127
        %v583 = vpop.permute.xlu0 %582
        %584 = vrot.lane.b32.xlu0 %v344, 127
        %v585 = vpop.permute.xlu0 %584
        %586 = vrot.lane.b32.xlu0 %v346, 127
        %v587 = vpop.permute.xlu0 %586
        %588 = vrot.lane.b32.xlu0 %v348, 127
        %v589 = vpop.permute.xlu0 %588
        %v592 = vpack.i.b16 %v585, %v583
        %v594 = vshrl.u32 %v583, 16
        %v595 = vshrl.u32 %v585, 16
        %v596 = vpack.i.b16 %v595, %v594
        %v600 = vpack.i.b16 %v589, %v587
        %v602 = vshrl.u32 %v587, 16
        %v603 = vshrl.u32 %v589, 16
        %v604 = vpack.i.b16 %v603, %v602
        %v606 = vcombine.high %v592, %v362
        %v608 = vunpack.c.l.s4 1983009808
        %v609 = vunpack.c.0.s8 %v608
        %v610 = vlaneseq
        %v611 = vshrl.u32 %v610, 7
        %v612 = vsub.s32 %v609, %v611
        %v613 = vrot.slane %v592, %v612
        %v615 = vunpack.c.l.s4 1983009808
        %v616 = vunpack.c.0.s8 %v615
        %v617 = vlaneseq
        %v618 = vshrl.u32 %v617, 7
        %v619 = vsub.s32 %v616, %v618
        %v620 = vrot.slane %v606, %v619
        %v621 = vcombine.high %v600, %v362
        %v623 = vunpack.c.l.s4 1983009808
        %v624 = vunpack.c.0.s8 %v623
        %v625 = vlaneseq
        %v626 = vshrl.u32 %v625, 7
        %v627 = vsub.s32 %v624, %v626
        %v628 = vrot.slane %v600, %v627
        %v630 = vunpack.c.l.s4 1983009808
        %v631 = vunpack.c.0.s8 %v630
        %v632 = vlaneseq
        %v633 = vshrl.u32 %v632, 7
        %v634 = vsub.s32 %v631, %v633
        %v635 = vrot.slane %v621, %v634
        %v636 = vcombine.low %v613, %v628
        %v637 = vcombine.high %v613, %v628
        %v639 = vunpack.c.l.s4 1934713408
        %v640 = vunpack.c.0.s8 %v639
        %v641 = vlaneseq
        %v642 = vshrl.u32 %v641, 7
        %v643 = vsub.s32 %v640, %v642
        %v644 = vrot.slane %v636, %v643
        %v646 = vunpack.c.l.s4 1934713408
        %v647 = vunpack.c.0.s8 %v646
        %v648 = vlaneseq
        %v649 = vshrl.u32 %v648, 7
        %v650 = vsub.s32 %v647, %v649
        %v651 = vrot.slane %v637, %v650
        %v652 = vcombine.low %v620, %v635
        %v653 = vcombine.high %v620, %v635
        %v655 = vunpack.c.l.s4 1934713408
        %v656 = vunpack.c.0.s8 %v655
        %v657 = vlaneseq
        %v658 = vshrl.u32 %v657, 7
        %v659 = vsub.s32 %v656, %v658
        %v660 = vrot.slane %v652, %v659
        %v662 = vunpack.c.l.s4 1934713408
        %v663 = vunpack.c.0.s8 %v662
        %v664 = vlaneseq
        %v665 = vshrl.u32 %v664, 7
        %v666 = vsub.s32 %v663, %v665
        %v667 = vrot.slane %v653, %v666
        %v668 = vcombine.high %v644, 0
        %v669 = vcombine.high %v651, 0
        %v670 = vcombine.high %v660, 0
        %v671 = vcombine.high %v667, 0
        %v672 = vcombine.high %v596, %v365
        %v674 = vunpack.c.l.s4 1983009808
        %v675 = vunpack.c.0.s8 %v674
        %v676 = vlaneseq
        %v677 = vshrl.u32 %v676, 7
        %v678 = vsub.s32 %v675, %v677
        %v679 = vrot.slane %v596, %v678
        %v681 = vunpack.c.l.s4 1983009808
        %v682 = vunpack.c.0.s8 %v681
        %v683 = vlaneseq
        %v684 = vshrl.u32 %v683, 7
        %v685 = vsub.s32 %v682, %v684
        %v686 = vrot.slane %v672, %v685
        %v687 = vcombine.high %v604, %v365
        %v689 = vunpack.c.l.s4 1983009808
        %v690 = vunpack.c.0.s8 %v689
        %v691 = vlaneseq
        %v692 = vshrl.u32 %v691, 7
        %v693 = vsub.s32 %v690, %v692
        %v694 = vrot.slane %v604, %v693
        %v696 = vunpack.c.l.s4 1983009808
        %v697 = vunpack.c.0.s8 %v696
        %v698 = vlaneseq
        %v699 = vshrl.u32 %v698, 7
        %v700 = vsub.s32 %v697, %v699
        %v701 = vrot.slane %v687, %v700
        %v702 = vcombine.low %v679, %v694
        %v703 = vcombine.high %v679, %v694
        %v705 = vunpack.c.l.s4 1934713408
        %v706 = vunpack.c.0.s8 %v705
        %v707 = vlaneseq
        %v708 = vshrl.u32 %v707, 7
        %v709 = vsub.s32 %v706, %v708
        %v710 = vrot.slane %v702, %v709
        %v712 = vunpack.c.l.s4 1934713408
        %v713 = vunpack.c.0.s8 %v712
        %v714 = vlaneseq
        %v715 = vshrl.u32 %v714, 7
        %v716 = vsub.s32 %v713, %v715
        %v717 = vrot.slane %v703, %v716
        %v718 = vcombine.low %v686, %v701
        %v719 = vcombine.high %v686, %v701
        %v721 = vunpack.c.l.s4 1934713408
        %v722 = vunpack.c.0.s8 %v721
        %v723 = vlaneseq
        %v724 = vshrl.u32 %v723, 7
        %v725 = vsub.s32 %v722, %v724
        %v726 = vrot.slane %v718, %v725
        %v728 = vunpack.c.l.s4 1934713408
        %v729 = vunpack.c.0.s8 %v728
        %v730 = vlaneseq
        %v731 = vshrl.u32 %v730, 7
        %v732 = vsub.s32 %v729, %v731
        %v733 = vrot.slane %v719, %v732
        %v734 = vcombine.high %v710, 0
        %v735 = vcombine.high %v717, 0
        %v736 = vcombine.high %v726, 0
        %v737 = vcombine.high %v733, 0
        %739 = vrot.lane.b32.xlu0 %v710, 16
        %v740 = vpop.permute.xlu0 %739
        %742 = vrot.lane.b32.xlu0 %v668, 32
        %v743 = vpop.permute.xlu0 %742
        %745 = vrot.lane.b32.xlu0 %v734, 48
        %v746 = vpop.permute.xlu0 %745
        %748 = vrot.lane.b32.xlu0 %v651, 64
        %v749 = vpop.permute.xlu0 %748
        %751 = vrot.lane.b32.xlu0 %v717, 80
        %v752 = vpop.permute.xlu0 %751
        %754 = vrot.lane.b32.xlu0 %v669, 96
        %v755 = vpop.permute.xlu0 %754
        %757 = vrot.lane.b32.xlu0 %v735, 112
        %v758 = vpop.permute.xlu0 %757
        %760 = vrot.lane.b32.xlu0 %v726, 16
        %v761 = vpop.permute.xlu0 %760
        %763 = vrot.lane.b32.xlu0 %v670, 32
        %v764 = vpop.permute.xlu0 %763
        %766 = vrot.lane.b32.xlu0 %v736, 48
        %v767 = vpop.permute.xlu0 %766
        %769 = vrot.lane.b32.xlu0 %v667, 64
        %v770 = vpop.permute.xlu0 %769
        %772 = vrot.lane.b32.xlu0 %v733, 80
        %v773 = vpop.permute.xlu0 %772
        %775 = vrot.lane.b32.xlu0 %v671, 96
        %v776 = vpop.permute.xlu0 %775
        %778 = vrot.lane.b32.xlu0 %v737, 112
        %v779 = vpop.permute.xlu0 %778
        %v782 = vsel %vm541, %v644, %v740
        %v784 = vsel %vm545, %v782, %v743
        %v786 = vsel %vm548, %v784, %v746
        %v788 = vsel %vm551, %v786, %v749
        %v790 = vsel %vm554, %v788, %v752
        %v792 = vsel %vm557, %v790, %v755
        %v794 = vsel %vm560, %v792, %v758
        %v797 = vsel %vm541, %v660, %v761
        %v799 = vsel %vm545, %v797, %v764
        %v801 = vsel %vm548, %v799, %v767
        %v803 = vsel %vm551, %v801, %v770
        %v805 = vsel %vm554, %v803, %v773
        %v807 = vsel %vm557, %v805, %v776
        %v809 = vsel %vm560, %v807, %v779
        %810 = vrot.lane.b32.xlu0 %v342, 126
        %v811 = vpop.permute.xlu0 %810
        %812 = vrot.lane.b32.xlu0 %v344, 126
        %v813 = vpop.permute.xlu0 %812
        %814 = vrot.lane.b32.xlu0 %v346, 126
        %v815 = vpop.permute.xlu0 %814
        %816 = vrot.lane.b32.xlu0 %v348, 126
        %v817 = vpop.permute.xlu0 %816
        %v820 = vpack.i.b16 %v813, %v811
        %v822 = vshrl.u32 %v811, 16
        %v823 = vshrl.u32 %v813, 16
        %v824 = vpack.i.b16 %v823, %v822
        %v828 = vpack.i.b16 %v817, %v815
        %v830 = vshrl.u32 %v815, 16
        %v831 = vshrl.u32 %v817, 16
        %v832 = vpack.i.b16 %v831, %v830
        %v834 = vcombine.high %v820, %v362
        %v836 = vunpack.c.l.s4 1983009808
        %v837 = vunpack.c.0.s8 %v836
        %v838 = vlaneseq
        %v839 = vshrl.u32 %v838, 7
        %v840 = vsub.s32 %v837, %v839
        %v841 = vrot.slane %v820, %v840
        %v843 = vunpack.c.l.s4 1983009808
        %v844 = vunpack.c.0.s8 %v843
        %v845 = vlaneseq
        %v846 = vshrl.u32 %v845, 7
        %v847 = vsub.s32 %v844, %v846
        %v848 = vrot.slane %v834, %v847
        %v849 = vcombine.high %v828, %v362
        %v851 = vunpack.c.l.s4 1983009808
        %v852 = vunpack.c.0.s8 %v851
        %v853 = vlaneseq
        %v854 = vshrl.u32 %v853, 7
        %v855 = vsub.s32 %v852, %v854
        %v856 = vrot.slane %v828, %v855
        %v858 = vunpack.c.l.s4 1983009808
        %v859 = vunpack.c.0.s8 %v858
        %v860 = vlaneseq
        %v861 = vshrl.u32 %v860, 7
        %v862 = vsub.s32 %v859, %v861
        %v863 = vrot.slane %v849, %v862
        %v864 = vcombine.low %v841, %v856
        %v865 = vcombine.high %v841, %v856
        %v867 = vunpack.c.l.s4 1934713408
        %v868 = vunpack.c.0.s8 %v867
        %v869 = vlaneseq
        %v870 = vshrl.u32 %v869, 7
        %v871 = vsub.s32 %v868, %v870
        %v872 = vrot.slane %v864, %v871
        %v874 = vunpack.c.l.s4 1934713408
        %v875 = vunpack.c.0.s8 %v874
        %v876 = vlaneseq
        %v877 = vshrl.u32 %v876, 7
        %v878 = vsub.s32 %v875, %v877
        %v879 = vrot.slane %v865, %v878
        %v880 = vcombine.low %v848, %v863
        %v881 = vcombine.high %v848, %v863
        %v883 = vunpack.c.l.s4 1934713408
        %v884 = vunpack.c.0.s8 %v883
        %v885 = vlaneseq
        %v886 = vshrl.u32 %v885, 7
        %v887 = vsub.s32 %v884, %v886
        %v888 = vrot.slane %v880, %v887
        %v890 = vunpack.c.l.s4 1934713408
        %v891 = vunpack.c.0.s8 %v890
        %v892 = vlaneseq
        %v893 = vshrl.u32 %v892, 7
        %v894 = vsub.s32 %v891, %v893
        %v895 = vrot.slane %v881, %v894
        %v896 = vcombine.high %v872, 0
        %v897 = vcombine.high %v879, 0
        %v898 = vcombine.high %v888, 0
        %v899 = vcombine.high %v895, 0
        %v900 = vcombine.high %v824, %v365
        %v902 = vunpack.c.l.s4 1983009808
        %v903 = vunpack.c.0.s8 %v902
        %v904 = vlaneseq
        %v905 = vshrl.u32 %v904, 7
        %v906 = vsub.s32 %v903, %v905
        %v907 = vrot.slane %v824, %v906
        %v909 = vunpack.c.l.s4 1983009808
        %v910 = vunpack.c.0.s8 %v909
        %v911 = vlaneseq
        %v912 = vshrl.u32 %v911, 7
        %v913 = vsub.s32 %v910, %v912
        %v914 = vrot.slane %v900, %v913
        %v915 = vcombine.high %v832, %v365
        %v917 = vunpack.c.l.s4 1983009808
        %v918 = vunpack.c.0.s8 %v917
        %v919 = vlaneseq
        %v920 = vshrl.u32 %v919, 7
        %v921 = vsub.s32 %v918, %v920
        %v922 = vrot.slane %v832, %v921
        %v924 = vunpack.c.l.s4 1983009808
        %v925 = vunpack.c.0.s8 %v924
        %v926 = vlaneseq
        %v927 = vshrl.u32 %v926, 7
        %v928 = vsub.s32 %v925, %v927
        %v929 = vrot.slane %v915, %v928
        %v930 = vcombine.low %v907, %v922
        %v931 = vcombine.high %v907, %v922
        %v933 = vunpack.c.l.s4 1934713408
        %v934 = vunpack.c.0.s8 %v933
        %v935 = vlaneseq
        %v936 = vshrl.u32 %v935, 7
        %v937 = vsub.s32 %v934, %v936
        %v938 = vrot.slane %v930, %v937
        %v940 = vunpack.c.l.s4 1934713408
        %v941 = vunpack.c.0.s8 %v940
        %v942 = vlaneseq
        %v943 = vshrl.u32 %v942, 7
        %v944 = vsub.s32 %v941, %v943
        %v945 = vrot.slane %v931, %v944
        %v946 = vcombine.low %v914, %v929
        %v947 = vcombine.high %v914, %v929
        %v949 = vunpack.c.l.s4 1934713408
        %v950 = vunpack.c.0.s8 %v949
        %v951 = vlaneseq
        %v952 = vshrl.u32 %v951, 7
        %v953 = vsub.s32 %v950, %v952
        %v954 = vrot.slane %v946, %v953
        %v956 = vunpack.c.l.s4 1934713408
        %v957 = vunpack.c.0.s8 %v956
        %v958 = vlaneseq
        %v959 = vshrl.u32 %v958, 7
        %v960 = vsub.s32 %v957, %v959
        %v961 = vrot.slane %v947, %v960
        %v962 = vcombine.high %v938, 0
        %v963 = vcombine.high %v945, 0
        %v964 = vcombine.high %v954, 0
        %v965 = vcombine.high %v961, 0
        %967 = vrot.lane.b32.xlu0 %v938, 16
        %v968 = vpop.permute.xlu0 %967
        %970 = vrot.lane.b32.xlu0 %v896, 32
        %v971 = vpop.permute.xlu0 %970
        %973 = vrot.lane.b32.xlu0 %v962, 48
        %v974 = vpop.permute.xlu0 %973
        %976 = vrot.lane.b32.xlu0 %v879, 64
        %v977 = vpop.permute.xlu0 %976
        %979 = vrot.lane.b32.xlu0 %v945, 80
        %v980 = vpop.permute.xlu0 %979
        %982 = vrot.lane.b32.xlu0 %v897, 96
        %v983 = vpop.permute.xlu0 %982
        %985 = vrot.lane.b32.xlu0 %v963, 112
        %v986 = vpop.permute.xlu0 %985
        %988 = vrot.lane.b32.xlu0 %v954, 16
        %v989 = vpop.permute.xlu0 %988
        %991 = vrot.lane.b32.xlu0 %v898, 32
        %v992 = vpop.permute.xlu0 %991
        %994 = vrot.lane.b32.xlu0 %v964, 48
        %v995 = vpop.permute.xlu0 %994
        %997 = vrot.lane.b32.xlu0 %v895, 64
        %v998 = vpop.permute.xlu0 %997
        %1000 = vrot.lane.b32.xlu0 %v961, 80
        %v1001 = vpop.permute.xlu0 %1000
        %1003 = vrot.lane.b32.xlu0 %v899, 96
        %v1004 = vpop.permute.xlu0 %1003
        %1006 = vrot.lane.b32.xlu0 %v965, 112
        %v1007 = vpop.permute.xlu0 %1006
        %v1010 = vsel %vm541, %v872, %v968
        %v1012 = vsel %vm545, %v1010, %v971
        %v1014 = vsel %vm548, %v1012, %v974
        %v1016 = vsel %vm551, %v1014, %v977
        %v1018 = vsel %vm554, %v1016, %v980
        %v1020 = vsel %vm557, %v1018, %v983
        %v1022 = vsel %vm560, %v1020, %v986
        %v1025 = vsel %vm541, %v888, %v989
        %v1027 = vsel %vm545, %v1025, %v992
        %v1029 = vsel %vm548, %v1027, %v995
        %v1031 = vsel %vm551, %v1029, %v998
        %v1033 = vsel %vm554, %v1031, %v1001
        %v1035 = vsel %vm557, %v1033, %v1004
        %v1037 = vsel %vm560, %v1035, %v1007
        %vm1038 = vsmask.f32 7424
        %v1040 = vshll.u32 %v342, 16
        %v1042 = vrot.slane %v1040, 1
        %v1043 = vor.u32 %v352, %v1042
        %v1044 = vshll.u32 %v343, 16
        %v1046 = vrot.slane %v1044, 1
        %v1047 = vsel %vm1038, %v1043, %v1046
        %v1049 = vshll.u32 %v344, 16
        %v1051 = vrot.slane %v1049, 1
        %v1052 = vor.u32 %v353, %v1051
        %v1053 = vshll.u32 %v345, 16
        %v1055 = vrot.slane %v1053, 1
        %v1056 = vsel %vm1038, %v1052, %v1055
        %v1058 = vshll.u32 %v346, 16
        %v1060 = vrot.slane %v1058, 1
        %v1061 = vor.u32 %v358, %v1060
        %v1062 = vshll.u32 %v347, 16
        %v1064 = vrot.slane %v1062, 1
        %v1065 = vsel %vm1038, %v1061, %v1064
        %v1067 = vshll.u32 %v348, 16
        %v1069 = vrot.slane %v1067, 1
        %v1070 = vor.u32 %v359, %v1069
        %v1071 = vshll.u32 %v349, 16
        %v1073 = vrot.slane %v1071, 1
        %v1074 = vsel %vm1038, %v1070, %v1073
        %v1077 = vpack.i.b16 %v1056, %v1047
        %v1079 = vshrl.u32 %v1047, 16
        %v1080 = vshrl.u32 %v1056, 16
        %v1081 = vpack.i.b16 %v1080, %v1079
        %v1085 = vpack.i.b16 %v1074, %v1065
        %v1087 = vshrl.u32 %v1065, 16
        %v1088 = vshrl.u32 %v1074, 16
        %v1089 = vpack.i.b16 %v1088, %v1087
        %v1091 = vcombine.high %v1077, %v362
        %v1093 = vunpack.c.l.s4 1983009808
        %v1094 = vunpack.c.0.s8 %v1093
        %v1095 = vlaneseq
        %v1096 = vshrl.u32 %v1095, 7
        %v1097 = vsub.s32 %v1094, %v1096
        %v1098 = vrot.slane %v1077, %v1097
        %v1100 = vunpack.c.l.s4 1983009808
        %v1101 = vunpack.c.0.s8 %v1100
        %v1102 = vlaneseq
        %v1103 = vshrl.u32 %v1102, 7
        %v1104 = vsub.s32 %v1101, %v1103
        %v1105 = vrot.slane %v1091, %v1104
        %v1106 = vcombine.high %v1085, %v362
        %v1108 = vunpack.c.l.s4 1983009808
        %v1109 = vunpack.c.0.s8 %v1108
        %v1110 = vlaneseq
        %v1111 = vshrl.u32 %v1110, 7
        %v1112 = vsub.s32 %v1109, %v1111
        %v1113 = vrot.slane %v1085, %v1112
        %v1115 = vunpack.c.l.s4 1983009808
        %v1116 = vunpack.c.0.s8 %v1115
        %v1117 = vlaneseq
        %v1118 = vshrl.u32 %v1117, 7
        %v1119 = vsub.s32 %v1116, %v1118
        %v1120 = vrot.slane %v1106, %v1119
        %v1121 = vcombine.low %v1098, %v1113
        %v1122 = vcombine.high %v1098, %v1113
        %v1124 = vunpack.c.l.s4 1934713408
        %v1125 = vunpack.c.0.s8 %v1124
        %v1126 = vlaneseq
        %v1127 = vshrl.u32 %v1126, 7
        %v1128 = vsub.s32 %v1125, %v1127
        %v1129 = vrot.slane %v1121, %v1128
        %v1131 = vunpack.c.l.s4 1934713408
        %v1132 = vunpack.c.0.s8 %v1131
        %v1133 = vlaneseq
        %v1134 = vshrl.u32 %v1133, 7
        %v1135 = vsub.s32 %v1132, %v1134
        %v1136 = vrot.slane %v1122, %v1135
        %v1137 = vcombine.low %v1105, %v1120
        %v1138 = vcombine.high %v1105, %v1120
        %v1140 = vunpack.c.l.s4 1934713408
        %v1141 = vunpack.c.0.s8 %v1140
        %v1142 = vlaneseq
        %v1143 = vshrl.u32 %v1142, 7
        %v1144 = vsub.s32 %v1141, %v1143
        %v1145 = vrot.slane %v1137, %v1144
        %v1147 = vunpack.c.l.s4 1934713408
        %v1148 = vunpack.c.0.s8 %v1147
        %v1149 = vlaneseq
        %v1150 = vshrl.u32 %v1149, 7
        %v1151 = vsub.s32 %v1148, %v1150
        %v1152 = vrot.slane %v1138, %v1151
        %v1153 = vcombine.high %v1129, 0
        %v1154 = vcombine.high %v1136, 0
        %v1155 = vcombine.high %v1145, 0
        %v1156 = vcombine.high %v1152, 0
        %v1157 = vcombine.high %v1081, %v365
        %v1159 = vunpack.c.l.s4 1983009808
        %v1160 = vunpack.c.0.s8 %v1159
        %v1161 = vlaneseq
        %v1162 = vshrl.u32 %v1161, 7
        %v1163 = vsub.s32 %v1160, %v1162
        %v1164 = vrot.slane %v1081, %v1163
        %v1166 = vunpack.c.l.s4 1983009808
        %v1167 = vunpack.c.0.s8 %v1166
        %v1168 = vlaneseq
        %v1169 = vshrl.u32 %v1168, 7
        %v1170 = vsub.s32 %v1167, %v1169
        %v1171 = vrot.slane %v1157, %v1170
        %v1172 = vcombine.high %v1089, %v365
        %v1174 = vunpack.c.l.s4 1983009808
        %v1175 = vunpack.c.0.s8 %v1174
        %v1176 = vlaneseq
        %v1177 = vshrl.u32 %v1176, 7
        %v1178 = vsub.s32 %v1175, %v1177
        %v1179 = vrot.slane %v1089, %v1178
        %v1181 = vunpack.c.l.s4 1983009808
        %v1182 = vunpack.c.0.s8 %v1181
        %v1183 = vlaneseq
        %v1184 = vshrl.u32 %v1183, 7
        %v1185 = vsub.s32 %v1182, %v1184
        %v1186 = vrot.slane %v1172, %v1185
        %v1187 = vcombine.low %v1164, %v1179
        %v1188 = vcombine.high %v1164, %v1179
        %v1190 = vunpack.c.l.s4 1934713408
        %v1191 = vunpack.c.0.s8 %v1190
        %v1192 = vlaneseq
        %v1193 = vshrl.u32 %v1192, 7
        %v1194 = vsub.s32 %v1191, %v1193
        %v1195 = vrot.slane %v1187, %v1194
        %v1197 = vunpack.c.l.s4 1934713408
        %v1198 = vunpack.c.0.s8 %v1197
        %v1199 = vlaneseq
        %v1200 = vshrl.u32 %v1199, 7
        %v1201 = vsub.s32 %v1198, %v1200
        %v1202 = vrot.slane %v1188, %v1201
        %v1203 = vcombine.low %v1171, %v1186
        %v1204 = vcombine.high %v1171, %v1186
        %v1206 = vunpack.c.l.s4 1934713408
        %v1207 = vunpack.c.0.s8 %v1206
        %v1208 = vlaneseq
        %v1209 = vshrl.u32 %v1208, 7
        %v1210 = vsub.s32 %v1207, %v1209
        %v1211 = vrot.slane %v1203, %v1210
        %v1213 = vunpack.c.l.s4 1934713408
        %v1214 = vunpack.c.0.s8 %v1213
        %v1215 = vlaneseq
        %v1216 = vshrl.u32 %v1215, 7
        %v1217 = vsub.s32 %v1214, %v1216
        %v1218 = vrot.slane %v1204, %v1217
        %v1219 = vcombine.high %v1195, 0
        %v1220 = vcombine.high %v1202, 0
        %v1221 = vcombine.high %v1211, 0
        %v1222 = vcombine.high %v1218, 0
        %1224 = vrot.lane.b32.xlu0 %v1195, 16
        %v1225 = vpop.permute.xlu0 %1224
        %1227 = vrot.lane.b32.xlu0 %v1153, 32
        %v1228 = vpop.permute.xlu0 %1227
        %1230 = vrot.lane.b32.xlu0 %v1219, 48
        %v1231 = vpop.permute.xlu0 %1230
        %1233 = vrot.lane.b32.xlu0 %v1136, 64
        %v1234 = vpop.permute.xlu0 %1233
        %1236 = vrot.lane.b32.xlu0 %v1202, 80
        %v1237 = vpop.permute.xlu0 %1236
        %1239 = vrot.lane.b32.xlu0 %v1154, 96
        %v1240 = vpop.permute.xlu0 %1239
        %1242 = vrot.lane.b32.xlu0 %v1220, 112
        %v1243 = vpop.permute.xlu0 %1242
        %1245 = vrot.lane.b32.xlu0 %v1211, 16
        %v1246 = vpop.permute.xlu0 %1245
        %1248 = vrot.lane.b32.xlu0 %v1155, 32
        %v1249 = vpop.permute.xlu0 %1248
        %1251 = vrot.lane.b32.xlu0 %v1221, 48
        %v1252 = vpop.permute.xlu0 %1251
        %1254 = vrot.lane.b32.xlu0 %v1152, 64
        %v1255 = vpop.permute.xlu0 %1254
        %1257 = vrot.lane.b32.xlu0 %v1218, 80
        %v1258 = vpop.permute.xlu0 %1257
        %1260 = vrot.lane.b32.xlu0 %v1156, 96
        %v1261 = vpop.permute.xlu0 %1260
        %1263 = vrot.lane.b32.xlu0 %v1222, 112
        %v1264 = vpop.permute.xlu0 %1263
        %v1267 = vsel %vm541, %v1129, %v1225
        %v1269 = vsel %vm545, %v1267, %v1228
        %v1271 = vsel %vm548, %v1269, %v1231
        %v1273 = vsel %vm551, %v1271, %v1234
        %v1275 = vsel %vm554, %v1273, %v1237
        %v1277 = vsel %vm557, %v1275, %v1240
        %v1279 = vsel %vm560, %v1277, %v1243
        %v1282 = vsel %vm541, %v1145, %v1246
        %v1284 = vsel %vm545, %v1282, %v1249
        %v1286 = vsel %vm548, %v1284, %v1252
        %v1288 = vsel %vm551, %v1286, %v1255
        %v1290 = vsel %vm554, %v1288, %v1258
        %v1292 = vsel %vm557, %v1290, %v1261
        %v1294 = vsel %vm560, %v1292, %v1264
        %1295 = vrot.lane.b32.xlu0 %v1047, 127
        %v1296 = vpop.permute.xlu0 %1295
        %1297 = vrot.lane.b32.xlu0 %v1056, 127
        %v1298 = vpop.permute.xlu0 %1297
        %1299 = vrot.lane.b32.xlu0 %v1065, 127
        %v1300 = vpop.permute.xlu0 %1299
        %1301 = vrot.lane.b32.xlu0 %v1074, 127
        %v1302 = vpop.permute.xlu0 %1301
        %v1305 = vpack.i.b16 %v1298, %v1296
        %v1307 = vshrl.u32 %v1296, 16
        %v1308 = vshrl.u32 %v1298, 16
        %v1309 = vpack.i.b16 %v1308, %v1307
        %v1313 = vpack.i.b16 %v1302, %v1300
        %v1315 = vshrl.u32 %v1300, 16
        %v1316 = vshrl.u32 %v1302, 16
        %v1317 = vpack.i.b16 %v1316, %v1315
        %v1319 = vcombine.high %v1305, %v362
        %v1321 = vunpack.c.l.s4 1983009808
        %v1322 = vunpack.c.0.s8 %v1321
        %v1323 = vlaneseq
        %v1324 = vshrl.u32 %v1323, 7
        %v1325 = vsub.s32 %v1322, %v1324
        %v1326 = vrot.slane %v1305, %v1325
        %v1328 = vunpack.c.l.s4 1983009808
        %v1329 = vunpack.c.0.s8 %v1328
        %v1330 = vlaneseq
        %v1331 = vshrl.u32 %v1330, 7
        %v1332 = vsub.s32 %v1329, %v1331
        %v1333 = vrot.slane %v1319, %v1332
        %v1334 = vcombine.high %v1313, %v362
        %v1336 = vunpack.c.l.s4 1983009808
        %v1337 = vunpack.c.0.s8 %v1336
        %v1338 = vlaneseq
        %v1339 = vshrl.u32 %v1338, 7
        %v1340 = vsub.s32 %v1337, %v1339
        %v1341 = vrot.slane %v1313, %v1340
        %v1343 = vunpack.c.l.s4 1983009808
        %v1344 = vunpack.c.0.s8 %v1343
        %v1345 = vlaneseq
        %v1346 = vshrl.u32 %v1345, 7
        %v1347 = vsub.s32 %v1344, %v1346
        %v1348 = vrot.slane %v1334, %v1347
        %v1349 = vcombine.low %v1326, %v1341
        %v1350 = vcombine.high %v1326, %v1341
        %v1352 = vunpack.c.l.s4 1934713408
        %v1353 = vunpack.c.0.s8 %v1352
        %v1354 = vlaneseq
        %v1355 = vshrl.u32 %v1354, 7
        %v1356 = vsub.s32 %v1353, %v1355
        %v1357 = vrot.slane %v1349, %v1356
        %v1359 = vunpack.c.l.s4 1934713408
        %v1360 = vunpack.c.0.s8 %v1359
        %v1361 = vlaneseq
        %v1362 = vshrl.u32 %v1361, 7
        %v1363 = vsub.s32 %v1360, %v1362
        %v1364 = vrot.slane %v1350, %v1363
        %v1365 = vcombine.low %v1333, %v1348
        %v1366 = vcombine.high %v1333, %v1348
        %v1368 = vunpack.c.l.s4 1934713408
        %v1369 = vunpack.c.0.s8 %v1368
        %v1370 = vlaneseq
        %v1371 = vshrl.u32 %v1370, 7
        %v1372 = vsub.s32 %v1369, %v1371
        %v1373 = vrot.slane %v1365, %v1372
        %v1375 = vunpack.c.l.s4 1934713408
        %v1376 = vunpack.c.0.s8 %v1375
        %v1377 = vlaneseq
        %v1378 = vshrl.u32 %v1377, 7
        %v1379 = vsub.s32 %v1376, %v1378
        %v1380 = vrot.slane %v1366, %v1379
        %v1381 = vcombine.high %v1357, 0
        %v1382 = vcombine.high %v1364, 0
        %v1383 = vcombine.high %v1373, 0
        %v1384 = vcombine.high %v1380, 0
        %v1385 = vcombine.high %v1309, %v365
        %v1387 = vunpack.c.l.s4 1983009808
        %v1388 = vunpack.c.0.s8 %v1387
        %v1389 = vlaneseq
        %v1390 = vshrl.u32 %v1389, 7
        %v1391 = vsub.s32 %v1388, %v1390
        %v1392 = vrot.slane %v1309, %v1391
        %v1394 = vunpack.c.l.s4 1983009808
        %v1395 = vunpack.c.0.s8 %v1394
        %v1396 = vlaneseq
        %v1397 = vshrl.u32 %v1396, 7
        %v1398 = vsub.s32 %v1395, %v1397
        %v1399 = vrot.slane %v1385, %v1398
        %v1400 = vcombine.high %v1317, %v365
        %v1402 = vunpack.c.l.s4 1983009808
        %v1403 = vunpack.c.0.s8 %v1402
        %v1404 = vlaneseq
        %v1405 = vshrl.u32 %v1404, 7
        %v1406 = vsub.s32 %v1403, %v1405
        %v1407 = vrot.slane %v1317, %v1406
        %v1409 = vunpack.c.l.s4 1983009808
        %v1410 = vunpack.c.0.s8 %v1409
        %v1411 = vlaneseq
        %v1412 = vshrl.u32 %v1411, 7
        %v1413 = vsub.s32 %v1410, %v1412
        %v1414 = vrot.slane %v1400, %v1413
        %v1415 = vcombine.low %v1392, %v1407
        %v1416 = vcombine.high %v1392, %v1407
        %v1418 = vunpack.c.l.s4 1934713408
        %v1419 = vunpack.c.0.s8 %v1418
        %v1420 = vlaneseq
        %v1421 = vshrl.u32 %v1420, 7
        %v1422 = vsub.s32 %v1419, %v1421
        %v1423 = vrot.slane %v1415, %v1422
        %v1425 = vunpack.c.l.s4 1934713408
        %v1426 = vunpack.c.0.s8 %v1425
        %v1427 = vlaneseq
        %v1428 = vshrl.u32 %v1427, 7
        %v1429 = vsub.s32 %v1426, %v1428
        %v1430 = vrot.slane %v1416, %v1429
        %v1431 = vcombine.low %v1399, %v1414
        %v1432 = vcombine.high %v1399, %v1414
        %v1434 = vunpack.c.l.s4 1934713408
        %v1435 = vunpack.c.0.s8 %v1434
        %v1436 = vlaneseq
        %v1437 = vshrl.u32 %v1436, 7
        %v1438 = vsub.s32 %v1435, %v1437
        %v1439 = vrot.slane %v1431, %v1438
        %v1441 = vunpack.c.l.s4 1934713408
        %v1442 = vunpack.c.0.s8 %v1441
        %v1443 = vlaneseq
        %v1444 = vshrl.u32 %v1443, 7
        %v1445 = vsub.s32 %v1442, %v1444
        %v1446 = vrot.slane %v1432, %v1445
        %v1447 = vcombine.high %v1423, 0
        %v1448 = vcombine.high %v1430, 0
        %v1449 = vcombine.high %v1439, 0
        %v1450 = vcombine.high %v1446, 0
        %1452 = vrot.lane.b32.xlu0 %v1423, 16
        %v1453 = vpop.permute.xlu0 %1452
        %1455 = vrot.lane.b32.xlu0 %v1381, 32
        %v1456 = vpop.permute.xlu0 %1455
        %1458 = vrot.lane.b32.xlu0 %v1447, 48
        %v1459 = vpop.permute.xlu0 %1458
        %1461 = vrot.lane.b32.xlu0 %v1364, 64
        %v1462 = vpop.permute.xlu0 %1461
        %1464 = vrot.lane.b32.xlu0 %v1430, 80
        %v1465 = vpop.permute.xlu0 %1464
        %1467 = vrot.lane.b32.xlu0 %v1382, 96
        %v1468 = vpop.permute.xlu0 %1467
        %1470 = vrot.lane.b32.xlu0 %v1448, 112
        %v1471 = vpop.permute.xlu0 %1470
        %1473 = vrot.lane.b32.xlu0 %v1439, 16
        %v1474 = vpop.permute.xlu0 %1473
        %1476 = vrot.lane.b32.xlu0 %v1383, 32
        %v1477 = vpop.permute.xlu0 %1476
        %1479 = vrot.lane.b32.xlu0 %v1449, 48
        %v1480 = vpop.permute.xlu0 %1479
        %1482 = vrot.lane.b32.xlu0 %v1380, 64
        %v1483 = vpop.permute.xlu0 %1482
        %1485 = vrot.lane.b32.xlu0 %v1446, 80
        %v1486 = vpop.permute.xlu0 %1485
        %1488 = vrot.lane.b32.xlu0 %v1384, 96
        %v1489 = vpop.permute.xlu0 %1488
        %1491 = vrot.lane.b32.xlu0 %v1450, 112
        %v1492 = vpop.permute.xlu0 %1491
        %v1495 = vsel %vm541, %v1357, %v1453
        %v1497 = vsel %vm545, %v1495, %v1456
        %v1499 = vsel %vm548, %v1497, %v1459
        %v1501 = vsel %vm551, %v1499, %v1462
        %v1503 = vsel %vm554, %v1501, %v1465
        %v1505 = vsel %vm557, %v1503, %v1468
        %v1507 = vsel %vm560, %v1505, %v1471
        %v1510 = vsel %vm541, %v1373, %v1474
        %v1512 = vsel %vm545, %v1510, %v1477
        %v1514 = vsel %vm548, %v1512, %v1480
        %v1516 = vsel %vm551, %v1514, %v1483
        %v1518 = vsel %vm554, %v1516, %v1486
        %v1520 = vsel %vm557, %v1518, %v1489
        %v1522 = vsel %vm560, %v1520, %v1492
        %1523 = vrot.lane.b32.xlu0 %v1047, 126
        %v1524 = vpop.permute.xlu0 %1523
        %1525 = vrot.lane.b32.xlu0 %v1056, 126
        %v1526 = vpop.permute.xlu0 %1525
        %1527 = vrot.lane.b32.xlu0 %v1065, 126
        %v1528 = vpop.permute.xlu0 %1527
        %1529 = vrot.lane.b32.xlu0 %v1074, 126
        %v1530 = vpop.permute.xlu0 %1529
        %v1533 = vpack.i.b16 %v1526, %v1524
        %v1535 = vshrl.u32 %v1524, 16
        %v1536 = vshrl.u32 %v1526, 16
        %v1537 = vpack.i.b16 %v1536, %v1535
        %v1541 = vpack.i.b16 %v1530, %v1528
        %v1543 = vshrl.u32 %v1528, 16
        %v1544 = vshrl.u32 %v1530, 16
        %v1545 = vpack.i.b16 %v1544, %v1543
        %v1547 = vcombine.high %v1533, %v362
        %v1549 = vunpack.c.l.s4 1983009808
        %v1550 = vunpack.c.0.s8 %v1549
        %v1551 = vlaneseq
        %v1552 = vshrl.u32 %v1551, 7
        %v1553 = vsub.s32 %v1550, %v1552
        %v1554 = vrot.slane %v1533, %v1553
        %v1556 = vunpack.c.l.s4 1983009808
        %v1557 = vunpack.c.0.s8 %v1556
        %v1558 = vlaneseq
        %v1559 = vshrl.u32 %v1558, 7
        %v1560 = vsub.s32 %v1557, %v1559
        %v1561 = vrot.slane %v1547, %v1560
        %v1562 = vcombine.high %v1541, %v362
        %v1564 = vunpack.c.l.s4 1983009808
        %v1565 = vunpack.c.0.s8 %v1564
        %v1566 = vlaneseq
        %v1567 = vshrl.u32 %v1566, 7
        %v1568 = vsub.s32 %v1565, %v1567
        %v1569 = vrot.slane %v1541, %v1568
        %v1571 = vunpack.c.l.s4 1983009808
        %v1572 = vunpack.c.0.s8 %v1571
        %v1573 = vlaneseq
        %v1574 = vshrl.u32 %v1573, 7
        %v1575 = vsub.s32 %v1572, %v1574
        %v1576 = vrot.slane %v1562, %v1575
        %v1577 = vcombine.low %v1554, %v1569
        %v1578 = vcombine.high %v1554, %v1569
        %v1580 = vunpack.c.l.s4 1934713408
        %v1581 = vunpack.c.0.s8 %v1580
        %v1582 = vlaneseq
        %v1583 = vshrl.u32 %v1582, 7
        %v1584 = vsub.s32 %v1581, %v1583
        %v1585 = vrot.slane %v1577, %v1584
        %v1587 = vunpack.c.l.s4 1934713408
        %v1588 = vunpack.c.0.s8 %v1587
        %v1589 = vlaneseq
        %v1590 = vshrl.u32 %v1589, 7
        %v1591 = vsub.s32 %v1588, %v1590
        %v1592 = vrot.slane %v1578, %v1591
        %v1593 = vcombine.low %v1561, %v1576
        %v1594 = vcombine.high %v1561, %v1576
        %v1596 = vunpack.c.l.s4 1934713408
        %v1597 = vunpack.c.0.s8 %v1596
        %v1598 = vlaneseq
        %v1599 = vshrl.u32 %v1598, 7
        %v1600 = vsub.s32 %v1597, %v1599
        %v1601 = vrot.slane %v1593, %v1600
        %v1603 = vunpack.c.l.s4 1934713408
        %v1604 = vunpack.c.0.s8 %v1603
        %v1605 = vlaneseq
        %v1606 = vshrl.u32 %v1605, 7
        %v1607 = vsub.s32 %v1604, %v1606
        %v1608 = vrot.slane %v1594, %v1607
        %v1609 = vcombine.high %v1585, 0
        %v1610 = vcombine.high %v1592, 0
        %v1611 = vcombine.high %v1601, 0
        %v1612 = vcombine.high %v1608, 0
        %v1613 = vcombine.high %v1537, %v365
        %v1615 = vunpack.c.l.s4 1983009808
        %v1616 = vunpack.c.0.s8 %v1615
        %v1617 = vlaneseq
        %v1618 = vshrl.u32 %v1617, 7
        %v1619 = vsub.s32 %v1616, %v1618
        %v1620 = vrot.slane %v1537, %v1619
        %v1622 = vunpack.c.l.s4 1983009808
        %v1623 = vunpack.c.0.s8 %v1622
        %v1624 = vlaneseq
        %v1625 = vshrl.u32 %v1624, 7
        %v1626 = vsub.s32 %v1623, %v1625
        %v1627 = vrot.slane %v1613, %v1626
        %v1628 = vcombine.high %v1545, %v365
        %v1630 = vunpack.c.l.s4 1983009808
        %v1631 = vunpack.c.0.s8 %v1630
        %v1632 = vlaneseq
        %v1633 = vshrl.u32 %v1632, 7
        %v1634 = vsub.s32 %v1631, %v1633
        %v1635 = vrot.slane %v1545, %v1634
        %v1637 = vunpack.c.l.s4 1983009808
        %v1638 = vunpack.c.0.s8 %v1637
        %v1639 = vlaneseq
        %v1640 = vshrl.u32 %v1639, 7
        %v1641 = vsub.s32 %v1638, %v1640
        %v1642 = vrot.slane %v1628, %v1641
        %v1643 = vcombine.low %v1620, %v1635
        %v1644 = vcombine.high %v1620, %v1635
        %v1646 = vunpack.c.l.s4 1934713408
        %v1647 = vunpack.c.0.s8 %v1646
        %v1648 = vlaneseq
        %v1649 = vshrl.u32 %v1648, 7
        %v1650 = vsub.s32 %v1647, %v1649
        %v1651 = vrot.slane %v1643, %v1650
        %v1653 = vunpack.c.l.s4 1934713408
        %v1654 = vunpack.c.0.s8 %v1653
        %v1655 = vlaneseq
        %v1656 = vshrl.u32 %v1655, 7
        %v1657 = vsub.s32 %v1654, %v1656
        %v1658 = vrot.slane %v1644, %v1657
        %v1659 = vcombine.low %v1627, %v1642
        %v1660 = vcombine.high %v1627, %v1642
        %v1662 = vunpack.c.l.s4 1934713408
        %v1663 = vunpack.c.0.s8 %v1662
        %v1664 = vlaneseq
        %v1665 = vshrl.u32 %v1664, 7
        %v1666 = vsub.s32 %v1663, %v1665
        %v1667 = vrot.slane %v1659, %v1666
        %v1669 = vunpack.c.l.s4 1934713408
        %v1670 = vunpack.c.0.s8 %v1669
        %v1671 = vlaneseq
        %v1672 = vshrl.u32 %v1671, 7
        %v1673 = vsub.s32 %v1670, %v1672
        %v1674 = vrot.slane %v1660, %v1673
        %v1675 = vcombine.high %v1651, 0
        %v1676 = vcombine.high %v1658, 0
        %v1677 = vcombine.high %v1667, 0
        %v1678 = vcombine.high %v1674, 0
        %1680 = vrot.lane.b32.xlu0 %v1651, 16
        %v1681 = vpop.permute.xlu0 %1680
        %1683 = vrot.lane.b32.xlu0 %v1609, 32
        %v1684 = vpop.permute.xlu0 %1683
        %1686 = vrot.lane.b32.xlu0 %v1675, 48
        %v1687 = vpop.permute.xlu0 %1686
        %1689 = vrot.lane.b32.xlu0 %v1592, 64
        %v1690 = vpop.permute.xlu0 %1689
        %1692 = vrot.lane.b32.xlu0 %v1658, 80
        %v1693 = vpop.permute.xlu0 %1692
        %1695 = vrot.lane.b32.xlu0 %v1610, 96
        %v1696 = vpop.permute.xlu0 %1695
        %1698 = vrot.lane.b32.xlu0 %v1676, 112
        %v1699 = vpop.permute.xlu0 %1698
        %1701 = vrot.lane.b32.xlu0 %v1667, 16
        %v1702 = vpop.permute.xlu0 %1701
        %1704 = vrot.lane.b32.xlu0 %v1611, 32
        %v1705 = vpop.permute.xlu0 %1704
        %1707 = vrot.lane.b32.xlu0 %v1677, 48
        %v1708 = vpop.permute.xlu0 %1707
        %1710 = vrot.lane.b32.xlu0 %v1608, 64
        %v1711 = vpop.permute.xlu0 %1710
        %1713 = vrot.lane.b32.xlu0 %v1674, 80
        %v1714 = vpop.permute.xlu0 %1713
        %1716 = vrot.lane.b32.xlu0 %v1612, 96
        %v1717 = vpop.permute.xlu0 %1716
        %1719 = vrot.lane.b32.xlu0 %v1678, 112
        %v1720 = vpop.permute.xlu0 %1719
        %v1723 = vsel %vm541, %v1585, %v1681
        %v1725 = vsel %vm545, %v1723, %v1684
        %v1727 = vsel %vm548, %v1725, %v1687
        %v1729 = vsel %vm551, %v1727, %v1690
        %v1731 = vsel %vm554, %v1729, %v1693
        %v1733 = vsel %vm557, %v1731, %v1696
        %v1735 = vsel %vm560, %v1733, %v1699
        %v1738 = vsel %vm541, %v1601, %v1702
        %v1740 = vsel %vm545, %v1738, %v1705
        %v1742 = vsel %vm548, %v1740, %v1708
        %v1744 = vsel %vm551, %v1742, %v1711
        %v1746 = vsel %vm554, %v1744, %v1714
        %v1748 = vsel %vm557, %v1746, %v1717
        %v1750 = vsel %vm560, %v1748, %v1720
        %vm1755 = vcmask 1046528
        %v1756 = vrot.slane %v342, 1
        %v1757 = vrot.slane %v343, 1
        %v1758 = vsel %vm1755, %v1756, %v1757
        %v1759 = vrot.slane %v344, 1
        %v1760 = vrot.slane %v345, 1
        %v1761 = vsel %vm1755, %v1759, %v1760
        %v1762 = vrot.slane %v346, 1
        %v1763 = vrot.slane %v347, 1
        %v1764 = vsel %vm1755, %v1762, %v1763
        %v1765 = vrot.slane %v348, 1
        %v1766 = vrot.slane %v349, 1
        %v1767 = vsel %vm1755, %v1765, %v1766
        %v1770 = vpack.i.b16 %v1761, %v1758
        %v1772 = vshrl.u32 %v1758, 16
        %v1773 = vshrl.u32 %v1761, 16
        %v1774 = vpack.i.b16 %v1773, %v1772
        %v1778 = vpack.i.b16 %v1767, %v1764
        %v1780 = vshrl.u32 %v1764, 16
        %v1781 = vshrl.u32 %v1767, 16
        %v1782 = vpack.i.b16 %v1781, %v1780
        %v1784 = vcombine.high %v1770, %v362
        %v1786 = vunpack.c.l.s4 1983009808
        %v1787 = vunpack.c.0.s8 %v1786
        %v1788 = vlaneseq
        %v1789 = vshrl.u32 %v1788, 7
        %v1790 = vsub.s32 %v1787, %v1789
        %v1791 = vrot.slane %v1770, %v1790
        %v1793 = vunpack.c.l.s4 1983009808
        %v1794 = vunpack.c.0.s8 %v1793
        %v1795 = vlaneseq
        %v1796 = vshrl.u32 %v1795, 7
        %v1797 = vsub.s32 %v1794, %v1796
        %v1798 = vrot.slane %v1784, %v1797
        %v1799 = vcombine.high %v1778, %v362
        %v1801 = vunpack.c.l.s4 1983009808
        %v1802 = vunpack.c.0.s8 %v1801
        %v1803 = vlaneseq
        %v1804 = vshrl.u32 %v1803, 7
        %v1805 = vsub.s32 %v1802, %v1804
        %v1806 = vrot.slane %v1778, %v1805
        %v1808 = vunpack.c.l.s4 1983009808
        %v1809 = vunpack.c.0.s8 %v1808
        %v1810 = vlaneseq
        %v1811 = vshrl.u32 %v1810, 7
        %v1812 = vsub.s32 %v1809, %v1811
        %v1813 = vrot.slane %v1799, %v1812
        %v1814 = vcombine.low %v1791, %v1806
        %v1815 = vcombine.high %v1791, %v1806
        %v1817 = vunpack.c.l.s4 1934713408
        %v1818 = vunpack.c.0.s8 %v1817
        %v1819 = vlaneseq
        %v1820 = vshrl.u32 %v1819, 7
        %v1821 = vsub.s32 %v1818, %v1820
        %v1822 = vrot.slane %v1814, %v1821
        %v1824 = vunpack.c.l.s4 1934713408
        %v1825 = vunpack.c.0.s8 %v1824
        %v1826 = vlaneseq
        %v1827 = vshrl.u32 %v1826, 7
        %v1828 = vsub.s32 %v1825, %v1827
        %v1829 = vrot.slane %v1815, %v1828
        %v1830 = vcombine.low %v1798, %v1813
        %v1831 = vcombine.high %v1798, %v1813
        %v1833 = vunpack.c.l.s4 1934713408
        %v1834 = vunpack.c.0.s8 %v1833
        %v1835 = vlaneseq
        %v1836 = vshrl.u32 %v1835, 7
        %v1837 = vsub.s32 %v1834, %v1836
        %v1838 = vrot.slane %v1830, %v1837
        %v1840 = vunpack.c.l.s4 1934713408
        %v1841 = vunpack.c.0.s8 %v1840
        %v1842 = vlaneseq
        %v1843 = vshrl.u32 %v1842, 7
        %v1844 = vsub.s32 %v1841, %v1843
        %v1845 = vrot.slane %v1831, %v1844
        %v1846 = vcombine.high %v1822, 0
        %v1847 = vcombine.high %v1829, 0
        %v1848 = vcombine.high %v1838, 0
        %v1849 = vcombine.high %v1845, 0
        %v1850 = vcombine.high %v1774, %v365
        %v1852 = vunpack.c.l.s4 1983009808
        %v1853 = vunpack.c.0.s8 %v1852
        %v1854 = vlaneseq
        %v1855 = vshrl.u32 %v1854, 7
        %v1856 = vsub.s32 %v1853, %v1855
        %v1857 = vrot.slane %v1774, %v1856
        %v1859 = vunpack.c.l.s4 1983009808
        %v1860 = vunpack.c.0.s8 %v1859
        %v1861 = vlaneseq
        %v1862 = vshrl.u32 %v1861, 7
        %v1863 = vsub.s32 %v1860, %v1862
        %v1864 = vrot.slane %v1850, %v1863
        %v1865 = vcombine.high %v1782, %v365
        %v1867 = vunpack.c.l.s4 1983009808
        %v1868 = vunpack.c.0.s8 %v1867
        %v1869 = vlaneseq
        %v1870 = vshrl.u32 %v1869, 7
        %v1871 = vsub.s32 %v1868, %v1870
        %v1872 = vrot.slane %v1782, %v1871
        %v1874 = vunpack.c.l.s4 1983009808
        %v1875 = vunpack.c.0.s8 %v1874
        %v1876 = vlaneseq
        %v1877 = vshrl.u32 %v1876, 7
        %v1878 = vsub.s32 %v1875, %v1877
        %v1879 = vrot.slane %v1865, %v1878
        %v1880 = vcombine.low %v1857, %v1872
        %v1881 = vcombine.high %v1857, %v1872
        %v1883 = vunpack.c.l.s4 1934713408
        %v1884 = vunpack.c.0.s8 %v1883
        %v1885 = vlaneseq
        %v1886 = vshrl.u32 %v1885, 7
        %v1887 = vsub.s32 %v1884, %v1886
        %v1888 = vrot.slane %v1880, %v1887
        %v1890 = vunpack.c.l.s4 1934713408
        %v1891 = vunpack.c.0.s8 %v1890
        %v1892 = vlaneseq
        %v1893 = vshrl.u32 %v1892, 7
        %v1894 = vsub.s32 %v1891, %v1893
        %v1895 = vrot.slane %v1881, %v1894
        %v1896 = vcombine.low %v1864, %v1879
        %v1897 = vcombine.high %v1864, %v1879
        %v1899 = vunpack.c.l.s4 1934713408
        %v1900 = vunpack.c.0.s8 %v1899
        %v1901 = vlaneseq
        %v1902 = vshrl.u32 %v1901, 7
        %v1903 = vsub.s32 %v1900, %v1902
        %v1904 = vrot.slane %v1896, %v1903
        %v1906 = vunpack.c.l.s4 1934713408
        %v1907 = vunpack.c.0.s8 %v1906
        %v1908 = vlaneseq
        %v1909 = vshrl.u32 %v1908, 7
        %v1910 = vsub.s32 %v1907, %v1909
        %v1911 = vrot.slane %v1897, %v1910
        %v1912 = vcombine.high %v1888, 0
        %v1913 = vcombine.high %v1895, 0
        %v1914 = vcombine.high %v1904, 0
        %v1915 = vcombine.high %v1911, 0
        %1917 = vrot.lane.b32.xlu0 %v1888, 16
        %v1918 = vpop.permute.xlu0 %1917
        %1920 = vrot.lane.b32.xlu0 %v1846, 32
        %v1921 = vpop.permute.xlu0 %1920
        %1923 = vrot.lane.b32.xlu0 %v1912, 48
        %v1924 = vpop.permute.xlu0 %1923
        %1926 = vrot.lane.b32.xlu0 %v1829, 64
        %v1927 = vpop.permute.xlu0 %1926
        %1929 = vrot.lane.b32.xlu0 %v1895, 80
        %v1930 = vpop.permute.xlu0 %1929
        %1932 = vrot.lane.b32.xlu0 %v1847, 96
        %v1933 = vpop.permute.xlu0 %1932
        %1935 = vrot.lane.b32.xlu0 %v1913, 112
        %v1936 = vpop.permute.xlu0 %1935
        %1938 = vrot.lane.b32.xlu0 %v1904, 16
        %v1939 = vpop.permute.xlu0 %1938
        %1941 = vrot.lane.b32.xlu0 %v1848, 32
        %v1942 = vpop.permute.xlu0 %1941
        %1944 = vrot.lane.b32.xlu0 %v1914, 48
        %v1945 = vpop.permute.xlu0 %1944
        %1947 = vrot.lane.b32.xlu0 %v1845, 64
        %v1948 = vpop.permute.xlu0 %1947
        %1950 = vrot.lane.b32.xlu0 %v1911, 80
        %v1951 = vpop.permute.xlu0 %1950
        %1953 = vrot.lane.b32.xlu0 %v1849, 96
        %v1954 = vpop.permute.xlu0 %1953
        %1956 = vrot.lane.b32.xlu0 %v1915, 112
        %v1957 = vpop.permute.xlu0 %1956
        %v1960 = vsel %vm541, %v1822, %v1918
        %v1962 = vsel %vm545, %v1960, %v1921
        %v1964 = vsel %vm548, %v1962, %v1924
        %v1966 = vsel %vm551, %v1964, %v1927
        %v1968 = vsel %vm554, %v1966, %v1930
        %v1970 = vsel %vm557, %v1968, %v1933
        %v1972 = vsel %vm560, %v1970, %v1936
        %v1975 = vsel %vm541, %v1838, %v1939
        %v1977 = vsel %vm545, %v1975, %v1942
        %v1979 = vsel %vm548, %v1977, %v1945
        %v1981 = vsel %vm551, %v1979, %v1948
        %v1983 = vsel %vm554, %v1981, %v1951
        %v1985 = vsel %vm557, %v1983, %v1954
        %v1987 = vsel %vm560, %v1985, %v1957
        %1988 = vrot.lane.b32.xlu0 %v1758, 127
        %v1989 = vpop.permute.xlu0 %1988
        %1990 = vrot.lane.b32.xlu0 %v1761, 127
        %v1991 = vpop.permute.xlu0 %1990
        %1992 = vrot.lane.b32.xlu0 %v1764, 127
        %v1993 = vpop.permute.xlu0 %1992
        %1994 = vrot.lane.b32.xlu0 %v1767, 127
        %v1995 = vpop.permute.xlu0 %1994
        %v1998 = vpack.i.b16 %v1991, %v1989
        %v2000 = vshrl.u32 %v1989, 16
        %v2001 = vshrl.u32 %v1991, 16
        %v2002 = vpack.i.b16 %v2001, %v2000
        %v2006 = vpack.i.b16 %v1995, %v1993
        %v2008 = vshrl.u32 %v1993, 16
        %v2009 = vshrl.u32 %v1995, 16
        %v2010 = vpack.i.b16 %v2009, %v2008
        %v2012 = vcombine.high %v1998, %v362
        %v2014 = vunpack.c.l.s4 1983009808
        %v2015 = vunpack.c.0.s8 %v2014
        %v2016 = vlaneseq
        %v2017 = vshrl.u32 %v2016, 7
        %v2018 = vsub.s32 %v2015, %v2017
        %v2019 = vrot.slane %v1998, %v2018
        %v2021 = vunpack.c.l.s4 1983009808
        %v2022 = vunpack.c.0.s8 %v2021
        %v2023 = vlaneseq
        %v2024 = vshrl.u32 %v2023, 7
        %v2025 = vsub.s32 %v2022, %v2024
        %v2026 = vrot.slane %v2012, %v2025
        %v2027 = vcombine.high %v2006, %v362
        %v2029 = vunpack.c.l.s4 1983009808
        %v2030 = vunpack.c.0.s8 %v2029
        %v2031 = vlaneseq
        %v2032 = vshrl.u32 %v2031, 7
        %v2033 = vsub.s32 %v2030, %v2032
        %v2034 = vrot.slane %v2006, %v2033
        %v2036 = vunpack.c.l.s4 1983009808
        %v2037 = vunpack.c.0.s8 %v2036
        %v2038 = vlaneseq
        %v2039 = vshrl.u32 %v2038, 7
        %v2040 = vsub.s32 %v2037, %v2039
        %v2041 = vrot.slane %v2027, %v2040
        %v2042 = vcombine.low %v2019, %v2034
        %v2043 = vcombine.high %v2019, %v2034
        %v2045 = vunpack.c.l.s4 1934713408
        %v2046 = vunpack.c.0.s8 %v2045
        %v2047 = vlaneseq
        %v2048 = vshrl.u32 %v2047, 7
        %v2049 = vsub.s32 %v2046, %v2048
        %v2050 = vrot.slane %v2042, %v2049
        %v2052 = vunpack.c.l.s4 1934713408
        %v2053 = vunpack.c.0.s8 %v2052
        %v2054 = vlaneseq
        %v2055 = vshrl.u32 %v2054, 7
        %v2056 = vsub.s32 %v2053, %v2055
        %v2057 = vrot.slane %v2043, %v2056
        %v2058 = vcombine.low %v2026, %v2041
        %v2059 = vcombine.high %v2026, %v2041
        %v2061 = vunpack.c.l.s4 1934713408
        %v2062 = vunpack.c.0.s8 %v2061
        %v2063 = vlaneseq
        %v2064 = vshrl.u32 %v2063, 7
        %v2065 = vsub.s32 %v2062, %v2064
        %v2066 = vrot.slane %v2058, %v2065
        %v2068 = vunpack.c.l.s4 1934713408
        %v2069 = vunpack.c.0.s8 %v2068
        %v2070 = vlaneseq
        %v2071 = vshrl.u32 %v2070, 7
        %v2072 = vsub.s32 %v2069, %v2071
        %v2073 = vrot.slane %v2059, %v2072
        %v2074 = vcombine.high %v2050, 0
        %v2075 = vcombine.high %v2057, 0
        %v2076 = vcombine.high %v2066, 0
        %v2077 = vcombine.high %v2073, 0
        %v2078 = vcombine.high %v2002, %v365
        %v2080 = vunpack.c.l.s4 1983009808
        %v2081 = vunpack.c.0.s8 %v2080
        %v2082 = vlaneseq
        %v2083 = vshrl.u32 %v2082, 7
        %v2084 = vsub.s32 %v2081, %v2083
        %v2085 = vrot.slane %v2002, %v2084
        %v2087 = vunpack.c.l.s4 1983009808
        %v2088 = vunpack.c.0.s8 %v2087
        %v2089 = vlaneseq
        %v2090 = vshrl.u32 %v2089, 7
        %v2091 = vsub.s32 %v2088, %v2090
        %v2092 = vrot.slane %v2078, %v2091
        %v2093 = vcombine.high %v2010, %v365
        %v2095 = vunpack.c.l.s4 1983009808
        %v2096 = vunpack.c.0.s8 %v2095
        %v2097 = vlaneseq
        %v2098 = vshrl.u32 %v2097, 7
        %v2099 = vsub.s32 %v2096, %v2098
        %v2100 = vrot.slane %v2010, %v2099
        %v2102 = vunpack.c.l.s4 1983009808
        %v2103 = vunpack.c.0.s8 %v2102
        %v2104 = vlaneseq
        %v2105 = vshrl.u32 %v2104, 7
        %v2106 = vsub.s32 %v2103, %v2105
        %v2107 = vrot.slane %v2093, %v2106
        %v2108 = vcombine.low %v2085, %v2100
        %v2109 = vcombine.high %v2085, %v2100
        %v2111 = vunpack.c.l.s4 1934713408
        %v2112 = vunpack.c.0.s8 %v2111
        %v2113 = vlaneseq
        %v2114 = vshrl.u32 %v2113, 7
        %v2115 = vsub.s32 %v2112, %v2114
        %v2116 = vrot.slane %v2108, %v2115
        %v2118 = vunpack.c.l.s4 1934713408
        %v2119 = vunpack.c.0.s8 %v2118
        %v2120 = vlaneseq
        %v2121 = vshrl.u32 %v2120, 7
        %v2122 = vsub.s32 %v2119, %v2121
        %v2123 = vrot.slane %v2109, %v2122
        %v2124 = vcombine.low %v2092, %v2107
        %v2125 = vcombine.high %v2092, %v2107
        %v2127 = vunpack.c.l.s4 1934713408
        %v2128 = vunpack.c.0.s8 %v2127
        %v2129 = vlaneseq
        %v2130 = vshrl.u32 %v2129, 7
        %v2131 = vsub.s32 %v2128, %v2130
        %v2132 = vrot.slane %v2124, %v2131
        %v2134 = vunpack.c.l.s4 1934713408
        %v2135 = vunpack.c.0.s8 %v2134
        %v2136 = vlaneseq
        %v2137 = vshrl.u32 %v2136, 7
        %v2138 = vsub.s32 %v2135, %v2137
        %v2139 = vrot.slane %v2125, %v2138
        %v2140 = vcombine.high %v2116, 0
        %v2141 = vcombine.high %v2123, 0
        %v2142 = vcombine.high %v2132, 0
        %v2143 = vcombine.high %v2139, 0
        %2145 = vrot.lane.b32.xlu0 %v2116, 16
        %v2146 = vpop.permute.xlu0 %2145
        %2148 = vrot.lane.b32.xlu0 %v2074, 32
        %v2149 = vpop.permute.xlu0 %2148
        %2151 = vrot.lane.b32.xlu0 %v2140, 48
        %v2152 = vpop.permute.xlu0 %2151
        %2154 = vrot.lane.b32.xlu0 %v2057, 64
        %v2155 = vpop.permute.xlu0 %2154
        %2157 = vrot.lane.b32.xlu0 %v2123, 80
        %v2158 = vpop.permute.xlu0 %2157
        %2160 = vrot.lane.b32.xlu0 %v2075, 96
        %v2161 = vpop.permute.xlu0 %2160
        %2163 = vrot.lane.b32.xlu0 %v2141, 112
        %v2164 = vpop.permute.xlu0 %2163
        %2166 = vrot.lane.b32.xlu0 %v2132, 16
        %v2167 = vpop.permute.xlu0 %2166
        %2169 = vrot.lane.b32.xlu0 %v2076, 32
        %v2170 = vpop.permute.xlu0 %2169
        %2172 = vrot.lane.b32.xlu0 %v2142, 48
        %v2173 = vpop.permute.xlu0 %2172
        %2175 = vrot.lane.b32.xlu0 %v2073, 64
        %v2176 = vpop.permute.xlu0 %2175
        %2178 = vrot.lane.b32.xlu0 %v2139, 80
        %v2179 = vpop.permute.xlu0 %2178
        %2181 = vrot.lane.b32.xlu0 %v2077, 96
        %v2182 = vpop.permute.xlu0 %2181
        %2184 = vrot.lane.b32.xlu0 %v2143, 112
        %v2185 = vpop.permute.xlu0 %2184
        %v2188 = vsel %vm541, %v2050, %v2146
        %v2190 = vsel %vm545, %v2188, %v2149
        %v2192 = vsel %vm548, %v2190, %v2152
        %v2194 = vsel %vm551, %v2192, %v2155
        %v2196 = vsel %vm554, %v2194, %v2158
        %v2198 = vsel %vm557, %v2196, %v2161
        %v2200 = vsel %vm560, %v2198, %v2164
        %v2203 = vsel %vm541, %v2066, %v2167
        %v2205 = vsel %vm545, %v2203, %v2170
        %v2207 = vsel %vm548, %v2205, %v2173
        %v2209 = vsel %vm551, %v2207, %v2176
        %v2211 = vsel %vm554, %v2209, %v2179
        %v2213 = vsel %vm557, %v2211, %v2182
        %v2215 = vsel %vm560, %v2213, %v2185
        %2216 = vrot.lane.b32.xlu0 %v1758, 126
        %v2217 = vpop.permute.xlu0 %2216
        %2218 = vrot.lane.b32.xlu0 %v1761, 126
        %v2219 = vpop.permute.xlu0 %2218
        %2220 = vrot.lane.b32.xlu0 %v1764, 126
        %v2221 = vpop.permute.xlu0 %2220
        %2222 = vrot.lane.b32.xlu0 %v1767, 126
        %v2223 = vpop.permute.xlu0 %2222
        %v2226 = vpack.i.b16 %v2219, %v2217
        %v2228 = vshrl.u32 %v2217, 16
        %v2229 = vshrl.u32 %v2219, 16
        %v2230 = vpack.i.b16 %v2229, %v2228
        %v2234 = vpack.i.b16 %v2223, %v2221
        %v2236 = vshrl.u32 %v2221, 16
        %v2237 = vshrl.u32 %v2223, 16
        %v2238 = vpack.i.b16 %v2237, %v2236
        %v2240 = vcombine.high %v2226, %v362
        %v2242 = vunpack.c.l.s4 1983009808
        %v2243 = vunpack.c.0.s8 %v2242
        %v2244 = vlaneseq
        %v2245 = vshrl.u32 %v2244, 7
        %v2246 = vsub.s32 %v2243, %v2245
        %v2247 = vrot.slane %v2226, %v2246
        %v2249 = vunpack.c.l.s4 1983009808
        %v2250 = vunpack.c.0.s8 %v2249
        %v2251 = vlaneseq
        %v2252 = vshrl.u32 %v2251, 7
        %v2253 = vsub.s32 %v2250, %v2252
        %v2254 = vrot.slane %v2240, %v2253
        %v2255 = vcombine.high %v2234, %v362
        %v2257 = vunpack.c.l.s4 1983009808
        %v2258 = vunpack.c.0.s8 %v2257
        %v2259 = vlaneseq
        %v2260 = vshrl.u32 %v2259, 7
        %v2261 = vsub.s32 %v2258, %v2260
        %v2262 = vrot.slane %v2234, %v2261
        %v2264 = vunpack.c.l.s4 1983009808
        %v2265 = vunpack.c.0.s8 %v2264
        %v2266 = vlaneseq
        %v2267 = vshrl.u32 %v2266, 7
        %v2268 = vsub.s32 %v2265, %v2267
        %v2269 = vrot.slane %v2255, %v2268
        %v2270 = vcombine.low %v2247, %v2262
        %v2271 = vcombine.high %v2247, %v2262
        %v2273 = vunpack.c.l.s4 1934713408
        %v2274 = vunpack.c.0.s8 %v2273
        %v2275 = vlaneseq
        %v2276 = vshrl.u32 %v2275, 7
        %v2277 = vsub.s32 %v2274, %v2276
        %v2278 = vrot.slane %v2270, %v2277
        %v2280 = vunpack.c.l.s4 1934713408
        %v2281 = vunpack.c.0.s8 %v2280
        %v2282 = vlaneseq
        %v2283 = vshrl.u32 %v2282, 7
        %v2284 = vsub.s32 %v2281, %v2283
        %v2285 = vrot.slane %v2271, %v2284
        %v2286 = vcombine.low %v2254, %v2269
        %v2287 = vcombine.high %v2254, %v2269
        %v2289 = vunpack.c.l.s4 1934713408
        %v2290 = vunpack.c.0.s8 %v2289
        %v2291 = vlaneseq
        %v2292 = vshrl.u32 %v2291, 7
        %v2293 = vsub.s32 %v2290, %v2292
        %v2294 = vrot.slane %v2286, %v2293
        %v2296 = vunpack.c.l.s4 1934713408
        %v2297 = vunpack.c.0.s8 %v2296
        %v2298 = vlaneseq
        %v2299 = vshrl.u32 %v2298, 7
        %v2300 = vsub.s32 %v2297, %v2299
        %v2301 = vrot.slane %v2287, %v2300
        %v2302 = vcombine.high %v2278, 0
        %v2303 = vcombine.high %v2285, 0
        %v2304 = vcombine.high %v2294, 0
        %v2305 = vcombine.high %v2301, 0
        %v2306 = vcombine.high %v2230, %v365
        %v2308 = vunpack.c.l.s4 1983009808
        %v2309 = vunpack.c.0.s8 %v2308
        %v2310 = vlaneseq
        %v2311 = vshrl.u32 %v2310, 7
        %v2312 = vsub.s32 %v2309, %v2311
        %v2313 = vrot.slane %v2230, %v2312
        %v2315 = vunpack.c.l.s4 1983009808
        %v2316 = vunpack.c.0.s8 %v2315
        %v2317 = vlaneseq
        %v2318 = vshrl.u32 %v2317, 7
        %v2319 = vsub.s32 %v2316, %v2318
        %v2320 = vrot.slane %v2306, %v2319
        %v2321 = vcombine.high %v2238, %v365
        %v2323 = vunpack.c.l.s4 1983009808
        %v2324 = vunpack.c.0.s8 %v2323
        %v2325 = vlaneseq
        %v2326 = vshrl.u32 %v2325, 7
        %v2327 = vsub.s32 %v2324, %v2326
        %v2328 = vrot.slane %v2238, %v2327
        %v2330 = vunpack.c.l.s4 1983009808
        %v2331 = vunpack.c.0.s8 %v2330
        %v2332 = vlaneseq
        %v2333 = vshrl.u32 %v2332, 7
        %v2334 = vsub.s32 %v2331, %v2333
        %v2335 = vrot.slane %v2321, %v2334
        %v2336 = vcombine.low %v2313, %v2328
        %v2337 = vcombine.high %v2313, %v2328
        %v2339 = vunpack.c.l.s4 1934713408
        %v2340 = vunpack.c.0.s8 %v2339
        %v2341 = vlaneseq
        %v2342 = vshrl.u32 %v2341, 7
        %v2343 = vsub.s32 %v2340, %v2342
        %v2344 = vrot.slane %v2336, %v2343
        %v2346 = vunpack.c.l.s4 1934713408
        %v2347 = vunpack.c.0.s8 %v2346
        %v2348 = vlaneseq
        %v2349 = vshrl.u32 %v2348, 7
        %v2350 = vsub.s32 %v2347, %v2349
        %v2351 = vrot.slane %v2337, %v2350
        %v2352 = vcombine.low %v2320, %v2335
        %v2353 = vcombine.high %v2320, %v2335
        %v2355 = vunpack.c.l.s4 1934713408
        %v2356 = vunpack.c.0.s8 %v2355
        %v2357 = vlaneseq
        %v2358 = vshrl.u32 %v2357, 7
        %v2359 = vsub.s32 %v2356, %v2358
        %v2360 = vrot.slane %v2352, %v2359
        %v2362 = vunpack.c.l.s4 1934713408
        %v2363 = vunpack.c.0.s8 %v2362
        %v2364 = vlaneseq
        %v2365 = vshrl.u32 %v2364, 7
        %v2366 = vsub.s32 %v2363, %v2365
        %v2367 = vrot.slane %v2353, %v2366
        %v2368 = vcombine.high %v2344, 0
        %v2369 = vcombine.high %v2351, 0
        %v2370 = vcombine.high %v2360, 0
        %v2371 = vcombine.high %v2367, 0
        %2373 = vrot.lane.b32.xlu0 %v2344, 16
        %v2374 = vpop.permute.xlu0 %2373
        %2376 = vrot.lane.b32.xlu0 %v2302, 32
        %v2377 = vpop.permute.xlu0 %2376
        %2379 = vrot.lane.b32.xlu0 %v2368, 48
        %v2380 = vpop.permute.xlu0 %2379
        %2382 = vrot.lane.b32.xlu0 %v2285, 64
        %v2383 = vpop.permute.xlu0 %2382
        %2385 = vrot.lane.b32.xlu0 %v2351, 80
        %v2386 = vpop.permute.xlu0 %2385
        %2388 = vrot.lane.b32.xlu0 %v2303, 96
        %v2389 = vpop.permute.xlu0 %2388
        %2391 = vrot.lane.b32.xlu0 %v2369, 112
        %v2392 = vpop.permute.xlu0 %2391
        %2394 = vrot.lane.b32.xlu0 %v2360, 16
        %v2395 = vpop.permute.xlu0 %2394
        %2397 = vrot.lane.b32.xlu0 %v2304, 32
        %v2398 = vpop.permute.xlu0 %2397
        %2400 = vrot.lane.b32.xlu0 %v2370, 48
        %v2401 = vpop.permute.xlu0 %2400
        %2403 = vrot.lane.b32.xlu0 %v2301, 64
        %v2404 = vpop.permute.xlu0 %2403
        %2406 = vrot.lane.b32.xlu0 %v2367, 80
        %v2407 = vpop.permute.xlu0 %2406
        %2409 = vrot.lane.b32.xlu0 %v2305, 96
        %v2410 = vpop.permute.xlu0 %2409
        %2412 = vrot.lane.b32.xlu0 %v2371, 112
        %v2413 = vpop.permute.xlu0 %2412
        %v2416 = vsel %vm541, %v2278, %v2374
        %v2418 = vsel %vm545, %v2416, %v2377
        %v2420 = vsel %vm548, %v2418, %v2380
        %v2422 = vsel %vm551, %v2420, %v2383
        %v2424 = vsel %vm554, %v2422, %v2386
        %v2426 = vsel %vm557, %v2424, %v2389
        %v2428 = vsel %vm560, %v2426, %v2392
        %v2431 = vsel %vm541, %v2294, %v2395
        %v2433 = vsel %vm545, %v2431, %v2398
        %v2435 = vsel %vm548, %v2433, %v2401
        %v2437 = vsel %vm551, %v2435, %v2404
        %v2439 = vsel %vm554, %v2437, %v2407
        %v2441 = vsel %vm557, %v2439, %v2410
        %v2443 = vsel %vm560, %v2441, %v2413
        %v2446 = vrot.slane %v794, 6
        %v2447 = vrot.slane %v809, 6
        %v2450 = vrot.slane %v1022, 4
        %v2451 = vrot.slane %v1037, 4
        %v2454 = vrot.slane %v1279, 2
        %v2455 = vrot.slane %v1294, 2
        %v2458 = vrot.slane %v1735, 6
        %v2459 = vrot.slane %v1750, 6
        %v2462 = vrot.slane %v1972, 4
        %v2463 = vrot.slane %v1987, 4
        %v2466 = vrot.slane %v2200, 2
        %v2467 = vrot.slane %v2215, 2
        %vm2468 = vcmask 1041408
        %v2470 = vsel %vm2468, %v562, %v2446
        %v2472 = vsel %vm2468, %v577, %v2447
        %vm2473 = vcmask 1043456
        %v2475 = vsel %vm2473, %v2470, %v2450
        %v2477 = vsel %vm2473, %v2472, %v2451
        %vm2478 = vcmask 1045504
        %v2480 = vsel %vm2478, %v2475, %v2454
        %v2483 = vsel %vm2478, %v2477, %v2455
        %v2486 = vsel %vm2468, %v1507, %v2458
        %v2488 = vsel %vm2468, %v1522, %v2459
        %v2490 = vsel %vm2473, %v2486, %v2462
        %v2492 = vsel %vm2473, %v2488, %v2463
        %v2494 = vsel %vm2478, %v2490, %v2466
        %v2497 = vsel %vm2478, %v2492, %v2467
        %v2499 = vld [vmem:[%s1] sm:$0xf]
        %vm2500 = vcmask 293888
        %v2502 = vsel %vm2500, %v2499, 0
        %v2504 = vsel %vm2468, %v2428, 0
        %v2506 = vsel %vm2468, %v2443, 0
        %2508 = vmatprep.subr.bf16.mxu0 0
        %2509 = vmatpush1.bf16.msra.mxu0 0
        %2510 = vmatprep.subr.bf16.mxu0 0
        %2511 = vmatpush1.bf16.msra.mxu0 0
        %2512 = vmatprep.subr.bf16.mxu0 0
        %2513 = vmatpush1.bf16.msra.mxu0 0
        %2514 = vmatprep.subr.bf16.mxu0 0
        %2515 = vmatpush1.bf16.msra.mxu0 0
        %2516 = vmatprep.subr.bf16.mxu0 0
        %2517 = vmatpush1.bf16.msra.mxu0 0
        %2518 = vmatprep.subr.bf16.mxu0 %v2506
        %2519 = vmatpush1.bf16.msra.mxu0 %v2504
        %2520 = vmatprep.subr.bf16.mxu0 %v2497
        %2521 = vmatpush1.bf16.msra.mxu0 %v2494
        %2522 = vmatprep.subr.bf16.mxu0 %v2483
        %2523 = vmatpush1.bf16.msra.mxu0 %v2480
        %2524 = vmatprep.subr.bf16.mxu0 0
        %2525 = vmatpush2.bf16.msra.mxu0 0
        %2526 = vmatprep.subr.bf16.mxu0 0
        %2527 = vmatpush2.bf16.msra.mxu0 0
        %2528 = vmatprep.subr.bf16.mxu0 0
        %2529 = vmatpush2.bf16.msra.mxu0 0
        %2530 = vmatprep.subr.bf16.mxu0 0
        %2531 = vmatpush2.bf16.msra.mxu0 0
        %2532 = vmatprep.subr.bf16.mxu0 0
        %2533 = vmatpush2.bf16.msra.mxu0 0
        %2534 = vmatprep.subr.bf16.mxu0 0
        %2535 = vmatpush2.bf16.msra.mxu0 0
        %2536 = vmatprep.subr.bf16.mxu0 0
        %2537 = vmatpush2.bf16.msra.mxu0 0
        %2538 = vmatprep.subr.bf16.mxu0 0
        %2539 = vmatpush2.bf16.msra.mxu0 0
        %2540 = vmatprep.mubr.bf16.mxu0 0
        %2541 = vmatmul.mubr.bf16.gmra.mxu0 %v2502
        %v2542 = vpop.f32.mrf.mxu0
        %v2543 = vadd.f32 0.0, %v2542
        %v2544 = vpop.f32.mrf.mxu0
        %v2545 = vadd.f32 0.0, %v2544
        %v2546 = vpop.f32.mrf.mxu0
        %v2547 = vpop.f32.mrf.mxu0
        %2548 = vdwg.mxu0
        %2549 = vst [vmem:[%s230] sm:$0xff] %v2543
        %2550 = vst [vmem:[%s230 + $0x8] sm:$0xff] %v2545
        %v2551 = vadd.f32 %v2543, %v2545
        %2552 = vadd.xlane.f32.xlu0 %v2551
        %v2553 = vpop.xlane.xlu0 %2552
        %2554 = vst.msk [vmem:[%s234] sm:$0xff] %vm323, %v2553
        %v2555 = vmul.f32 %v2543, %v2543
        %v2556 = vmul.f32 %v2545, %v2545
        %v2557 = vadd.f32 %v2555, %v2556
        %2558 = vadd.xlane.f32.xlu0 %v2557
        %v2559 = vpop.xlane.xlu0 %2558
        %2560 = vst.msk [vmem:[%s238] sm:$0xff] %vm323, %v2559
        %p2561 = scmp.lt.s32.totalorder %s19, 1
        %s2562 = scalar_select %p2561, %s19, 1
        %s2563 = smul.addr %s2562, 2
        %s2564 = smul.addr %s2563, 8
        %s2565 = scalar_lea.vmem %s2, %s2564
        %p2566 = scmp.lt.s32.totalorder %s19, 1
        %s2567 = scalar_select %p2566, %s19, 1
        %s2568 = smul.addr %s2567, 8
        %s2569 = scalar_lea.vmem %s3, %s2568
        %p2570 = scmp.lt.s32.totalorder %s19, 1
        %s2571 = scalar_select %p2570, %s19, 1
        %s2572 = smul.addr %s2571, 8
        %s2573 = scalar_lea.vmem %s4, %s2572
        // Predicated region
        $region33: #{_conv_bn_relu_impl.2} parent=27 // pred_check
          %p2574 = pneg %p84
        $region34: #{_conv_bn_relu_impl.2} parent=27 // pred_check_branch
          %2576 = sbr.rel (%p2574) target = $region36
        $region35: #{_conv_bn_relu_impl.2} parent=27 // pred_region
          _
        $region36: #{_conv_bn_relu_impl.2} parent=27 // pred_fallthru
          _
        // Predicated region
        $region37: #{_conv_bn_relu_impl.2} parent=27 // pred_check
          %p2577 = pneg %p110
        $region38: #{_conv_bn_relu_impl.2} parent=27 // pred_check_branch
          %2579 = sbr.rel (%p2577) target = $region40
        $region39: #{_conv_bn_relu_impl.2} parent=27 // pred_region
          _
        $region40: #{_conv_bn_relu_impl.2} parent=27 // pred_fallthru
          _
        // Predicated region
        $region41: #{_conv_bn_relu_impl.2} parent=27 // pred_check
          %p2580 = pneg %p136
        $region42: #{_conv_bn_relu_impl.2} parent=27 // pred_check_branch
          %2582 = sbr.rel (%p2580) target = $region44
        $region43: #{_conv_bn_relu_impl.2} parent=27 // pred_region
          _
        $region44: #{_conv_bn_relu_impl.2} parent=27 // pred_fallthru
          _
      $region28: #{_conv_bn_relu_impl.2} parent=5 // pred_fallthru
        _
      %p2583 = scmp.le.s32.totalorder 2, %s14
      // Predicated region
      $region45: #{_conv_bn_relu_impl.2} parent=5 // pred_check
        %p2584 = pneg %p2583
      $region46: #{_conv_bn_relu_impl.2} parent=5 // pred_check_branch
        %2586 = sbr.rel (%p2584) target = $region48
      $region47: #{_conv_bn_relu_impl.2} parent=5 // pred_region
        %s2587 = ssub.s32 %s14, 2
        // Predicated region
        $region49: #{_conv_bn_relu_impl.2} parent=47 // pred_check
          %p2588 = pneg %p90
        $region50: #{_conv_bn_relu_impl.2} parent=47 // pred_check_branch
          %2590 = sbr.rel (%p2588) target = $region52
        $region51: #{_conv_bn_relu_impl.2} parent=47 // pred_region
          %p2591 = scmp.lt.s32.totalorder %s20, 1
          %s2592 = scalar_select %p2591, %s20, 1
          %s2593 = smul.addr %s2592, 2
          %s2594 = smul.addr %s2593, 8
          %s2595 = scalar_lea.vmem %s2, %s2594
        $region52: #{_conv_bn_relu_impl.2} parent=47 // pred_fallthru
          _
        // Predicated region
        $region53: #{_conv_bn_relu_impl.2} parent=47 // pred_check
          %p2596 = pneg %p116
        $region54: #{_conv_bn_relu_impl.2} parent=47 // pred_check_branch
          %2598 = sbr.rel (%p2596) target = $region56
        $region55: #{_conv_bn_relu_impl.2} parent=47 // pred_region
          %p2599 = scmp.lt.s32.totalorder %s20, 1
          %s2600 = scalar_select %p2599, %s20, 1
          %s2601 = smul.addr %s2600, 8
          %s2602 = scalar_lea.vmem %s3, %s2601
        $region56: #{_conv_bn_relu_impl.2} parent=47 // pred_fallthru
          _
        // Predicated region
        $region57: #{_conv_bn_relu_impl.2} parent=47 // pred_check
          %p2603 = pneg %p142
        $region58: #{_conv_bn_relu_impl.2} parent=47 // pred_check_branch
          %2605 = sbr.rel (%p2603) target = $region60
        $region59: #{_conv_bn_relu_impl.2} parent=47 // pred_region
          %p2606 = scmp.lt.s32.totalorder %s20, 1
          %s2607 = scalar_select %p2606, %s20, 1
          %s2608 = smul.addr %s2607, 8
          %s2609 = scalar_lea.vmem %s4, %s2608
        $region60: #{_conv_bn_relu_impl.2} parent=47 // pred_fallthru
          _
      $region48: #{_conv_bn_relu_impl.2} parent=5 // pred_fallthru
        _
    $region6: #{_conv_bn_relu_impl.2} parent=1 // loop_footer
      %s18 = sadd.s32 1, %s14
    $region7: #{_conv_bn_relu_impl.2} parent=1 // loop_footer_branch
      %13 = sbr.rel target = $region3
    $region8: #{_conv_bn_relu_impl.2} parent=1 // loop_exit
      _
    %2610 = vsyncpa [#allocation3], 1
    %s2611 = scalar_lea.sflag [#allocation3], 1
    %2612 = vsyncpa %s2611, 1

</llo_original>
